<compile_context>
chip_gen: v5e
topology: v5e:2x2
jax: 0.10.0
libtpu: 0.0.40
codegen_flags: <defaults>
</compile_context>

<pallas_src>
import functools
import math

import jax
import jax.numpy as jnp
from jax.experimental import pallas as pl
from jax.experimental.pallas import tpu as pltpu


# ----------------------------------------------------------------------------
# Helpers
# ----------------------------------------------------------------------------
_GELU_C = math.sqrt(2.0 / math.pi)
_VMEM_LIMIT = 32 * 1024 * 1024  # >= v5e default (16 MiB), <= physical everywhere


@functools.lru_cache(maxsize=1)
def _has_bf16_eup():
    """bf16 transcendentals (EUP) exist from v6e on; keep f32 on older gens."""
    try:
        kind = jax.devices()[0].device_kind.lower()
    except Exception:
        return False
    return not any(v in kind for v in ("v2", "v3", "v4", "v5"))


def _gelu(y):
    # TODO(synk): torch nn.GELU() default is the exact erf GELU; using the
    # tanh approximation here (Mosaic-safe transcendentals, BERT-standard).
    return 0.5 * y * (1.0 + jnp.tanh(_GELU_C * (y + 0.044715 * y * y * y)))


def _pick_tile(dim, preferred, align):
    """Largest tile <= preferred that divides `dim` and is a multiple of
    `align`; falls back to the full dimension (always legal for BlockSpec)."""
    if dim <= preferred:
        return dim
    t = (preferred // align) * align
    while t >= align:
        if dim % t == 0:
            return t
        t -= align
    return dim


# ----------------------------------------------------------------------------
# Tiled dense matmul: y = x @ w + b, bf16 MXU inputs, f32 accumulation
# ----------------------------------------------------------------------------
def _dense_kernel(x_ref, w_ref, b_ref, o_ref, acc_ref):
    @pl.when(pl.program_id(2) == 0)
    def _():
        acc_ref[...] = jnp.zeros_like(acc_ref)

    acc_ref[...] += jnp.dot(x_ref[...], w_ref[...],
                            preferred_element_type=jnp.float32)

    @pl.when(pl.program_id(2) == pl.num_programs(2) - 1)
    def _():
        o_ref[...] = (acc_ref[...] + b_ref[...]).astype(o_ref.dtype)


def dense(x, w, b=None, out_dtype=jnp.float32, tm=256, tn=512, tk=512):
    """Tiled (M, N, K) matmul with double-buffered BlockSpecs."""
    M, K = x.shape
    K2, N = w.shape
    assert K == K2
    if b is None:
        b = jnp.zeros((N,), jnp.float32)
    bm = _pick_tile(M, tm, 16)       # 16: bf16 sublane packing
    bn = _pick_tile(N, tn, 128)
    bk = _pick_tile(K, tk, 128)
    grid = (M // bm, N // bn, K // bk)
    return pl.pallas_call(
        _dense_kernel,
        grid=grid,
        in_specs=[
            pl.BlockSpec((bm, bk), lambda i, j, k: (i, k)),
            pl.BlockSpec((bk, bn), lambda i, j, k: (k, j)),
            pl.BlockSpec((1, bn), lambda i, j, k: (0, j)),
        ],
        out_specs=pl.BlockSpec((bm, bn), lambda i, j, k: (i, j)),
        out_shape=jax.ShapeDtypeStruct((M, N), out_dtype),
        scratch_shapes=[pltpu.VMEM((bm, bn), jnp.float32)],
        compiler_params=pltpu.CompilerParams(
            dimension_semantics=("parallel", "parallel", "arbitrary"),
            vmem_limit_bytes=_VMEM_LIMIT),
    )(x.astype(jnp.bfloat16), w.astype(jnp.bfloat16),
      b.reshape(1, N).astype(jnp.float32))


# ----------------------------------------------------------------------------
# Attention: grid over (batch, head), head-major layout, K pre-transposed.
# No in-kernel lane slicing, no concat, no XLU transpose of K.
# ----------------------------------------------------------------------------
def _attn_kernel(mask_ref, q_ref, kt_ref, v_ref, o_ref, *, scale):
    neg = mask_ref[...]                     # (1, S) additive mask, f32
    q = q_ref[...]                          # (S, dh)  bf16
    kt = kt_ref[...]                        # (dh, S)  bf16 (pre-transposed K)
    v = v_ref[...]                          # (S, dh)  bf16
    # TODO(synk): for S >~ 512 add a q-tile grid axis with online softmax
    # (flash-style) instead of materializing the full (S, S) score matrix.
    s = jnp.dot(q, kt, preferred_element_type=jnp.float32) * scale + neg
    s = s - jnp.max(s, axis=-1, keepdims=True)
    p = jnp.exp(s)
    p = p * pl.reciprocal(jnp.sum(p, axis=-1, keepdims=True), approx=True)
    o_ref[...] = jnp.dot(p.astype(v.dtype), v,
                         preferred_element_type=jnp.float32).astype(o_ref.dtype)


def mha_attention(qkv, neg_mask, n_heads, d_model):
    """qkv: (B, S, 3D) bf16, neg_mask: (B, 1, S) f32 -> context (B, S, D)."""
    B, S, _ = qkv.shape
    dh = d_model // n_heads
    # Head-major layout plumbing in XLA (cheap, lane-dense) so the kernel only
    # ever touches full trailing-dim blocks.
    qkv = qkv.reshape(B, S, 3, n_heads, dh)
    q = jnp.transpose(qkv[:, :, 0], (0, 2, 1, 3))     # (B, H, S, dh)
    kt = jnp.transpose(qkv[:, :, 1], (0, 2, 3, 1))    # (B, H, dh, S)
    v = jnp.transpose(qkv[:, :, 2], (0, 2, 1, 3))     # (B, H, S, dh)
    kernel = functools.partial(_attn_kernel, scale=1.0 / math.sqrt(dh))
    ctx = pl.pallas_call(
        kernel,
        grid=(B, n_heads),
        in_specs=[
            pl.BlockSpec((None, 1, S), lambda b, h: (b, 0, 0)),
            pl.BlockSpec((None, None, S, dh), lambda b, h: (b, h, 0, 0)),
            pl.BlockSpec((None, None, dh, S), lambda b, h: (b, h, 0, 0)),
            pl.BlockSpec((None, None, S, dh), lambda b, h: (b, h, 0, 0)),
        ],
        out_specs=pl.BlockSpec((None, None, S, dh), lambda b, h: (b, h, 0, 0)),
        out_shape=jax.ShapeDtypeStruct((B, n_heads, S, dh), jnp.bfloat16),
        compiler_params=pltpu.CompilerParams(
            dimension_semantics=("parallel", "parallel")),
    )(neg_mask, q, kt, v)
    # back to token-major with heads concatenated along features (torch layout)
    return jnp.transpose(ctx, (0, 2, 1, 3)).reshape(B, S, d_model)


# ----------------------------------------------------------------------------
# Fused: output-projection + residual add + LayerNorm
# (the (D, D) projection weight is small; it stays resident per grid step)
# ----------------------------------------------------------------------------
def _dense_add_ln_kernel(x_ref, w_ref, b_ref, r_ref, g_ref, be_ref, o_ref, *, eps):
    y = jnp.dot(x_ref[...], w_ref[...], preferred_element_type=jnp.float32)
    y = y + b_ref[...] + r_ref[...].astype(jnp.float32)
    mu = jnp.mean(y, axis=-1, keepdims=True)
    var = jnp.mean(jnp.square(y - mu), axis=-1, keepdims=True)
    o_ref[...] = ((y - mu) * jax.lax.rsqrt(var + eps) * g_ref[...]
                  + be_ref[...]).astype(o_ref.dtype)


def dense_add_layernorm(x, w, b, res, gamma, beta, eps=1e-5, tm=256):
    M, K = x.shape
    _, N = w.shape
    bm = _pick_tile(M, tm, 16)
    kernel = functools.partial(_dense_add_ln_kernel, eps=eps)
    return pl.pallas_call(
        kernel,
        grid=(M // bm,),
        in_specs=[
            pl.BlockSpec((bm, K), lambda i: (i, 0)),
            pl.BlockSpec((K, N), lambda i: (0, 0)),
            pl.BlockSpec((1, N), lambda i: (0, 0)),
            pl.BlockSpec((bm, N), lambda i: (i, 0)),
            pl.BlockSpec((1, N), lambda i: (0, 0)),
            pl.BlockSpec((1, N), lambda i: (0, 0)),
        ],
        out_specs=pl.BlockSpec((bm, N), lambda i: (i, 0)),
        out_shape=jax.ShapeDtypeStruct((M, N), jnp.bfloat16),
        compiler_params=pltpu.CompilerParams(
            dimension_semantics=("parallel",),
            vmem_limit_bytes=_VMEM_LIMIT),
    )(x.astype(jnp.bfloat16), w.astype(jnp.bfloat16),
      b.reshape(1, N).astype(jnp.float32), res.astype(jnp.bfloat16),
      gamma.reshape(1, N).astype(jnp.float32),
      beta.reshape(1, N).astype(jnp.float32))


# ----------------------------------------------------------------------------
# Fused FFN: W1 + GELU + W2 + residual add + LayerNorm, tiled over F
# (f32 VMEM accumulator; only (D,bf)/(bf,D) weight tiles resident -> fits
# v5e's 16 MiB scoped VMEM and leaves headroom on v7x's 64 MiB)
# ----------------------------------------------------------------------------
def _ffn_ln_kernel(x_ref, w1_ref, b1_ref, w2_ref, b2_ref, r_ref, g_ref, be_ref,
                   o_ref, acc_ref, *, eps, gelu_dtype):
    @pl.when(pl.program_id(1) == 0)
    def _():
        acc_ref[...] = jnp.zeros_like(acc_ref)

    h = jnp.dot(x_ref[...], w1_ref[...], preferred_element_type=jnp.float32)
    # bf16 tanh on chips with a bf16 EUP (v6e+); f32 elsewhere.
    h = _gelu((h + b1_ref[...]).astype(gelu_dtype))
    acc_ref[...] += jnp.dot(h.astype(jnp.bfloat16), w2_ref[...],
                            preferred_element_type=jnp.float32)

    @pl.when(pl.program_id(1) == pl.num_programs(1) - 1)
    def _():
        y = acc_ref[...] + b2_ref[...] + r_ref[...].astype(jnp.float32)
        mu = jnp.mean(y, axis=-1, keepdims=True)
        var = jnp.mean(jnp.square(y - mu), axis=-1, keepdims=True)
        o_ref[...] = ((y - mu) * jax.lax.rsqrt(var + eps) * g_ref[...]
                      + be_ref[...]).astype(o_ref.dtype)


def ffn_layernorm(x, w1, b1, w2, b2, res, gamma, beta, eps=1e-5, tm=256, tf=512):
    M, D = x.shape
    _, F = w1.shape
    bm = _pick_tile(M, tm, 16)
    bf = _pick_tile(F, tf, 128)
    gelu_dtype = jnp.bfloat16 if _has_bf16_eup() else jnp.float32
    kernel = functools.partial(_ffn_ln_kernel, eps=eps, gelu_dtype=gelu_dtype)
    return pl.pallas_call(
        kernel,
        grid=(M // bm, F // bf),
        in_specs=[
            pl.BlockSpec((bm, D), lambda i, f: (i, 0)),
            pl.BlockSpec((D, bf), lambda i, f: (0, f)),
            pl.BlockSpec((1, bf), lambda i, f: (0, f)),
            pl.BlockSpec((bf, D), lambda i, f: (f, 0)),
            pl.BlockSpec((1, D), lambda i, f: (0, 0)),
            pl.BlockSpec((bm, D), lambda i, f: (i, 0)),
            pl.BlockSpec((1, D), lambda i, f: (0, 0)),
            pl.BlockSpec((1, D), lambda i, f: (0, 0)),
        ],
        out_specs=pl.BlockSpec((bm, D), lambda i, f: (i, 0)),
        out_shape=jax.ShapeDtypeStruct((M, D), jnp.bfloat16),
        scratch_shapes=[pltpu.VMEM((bm, D), jnp.float32)],
        compiler_params=pltpu.CompilerParams(
            dimension_semantics=("parallel", "arbitrary"),
            vmem_limit_bytes=_VMEM_LIMIT),
    )(x.astype(jnp.bfloat16), w1.astype(jnp.bfloat16),
      b1.reshape(1, F).astype(jnp.float32), w2.astype(jnp.bfloat16),
      b2.reshape(1, D).astype(jnp.float32), res.astype(jnp.bfloat16),
      gamma.reshape(1, D).astype(jnp.float32),
      beta.reshape(1, D).astype(jnp.float32))


# ----------------------------------------------------------------------------
# Parameters (deterministic synthetic init) and model glue
# ----------------------------------------------------------------------------
def init_params(key, vocab_size, d_model, d_ff, n_layers, max_len):
    def nrm(k, shape, scale=0.02):
        return scale * jax.random.normal(k, shape, jnp.float32)

    v_pad = ((vocab_size + 127) // 128) * 128     # lane-tileable vocab dim
    keys = jax.random.split(key, 4 + n_layers)
    token_emb = nrm(keys[0], (vocab_size, d_model))
    params = {
        "token_emb": token_emb,                                  # f_emb.token_emb.weight
        "pos_emb":   nrm(keys[1], (max_len, d_model)),
        "seg_emb":   nrm(keys[2], (2, d_model)),
        # nn.Linear(d_model, vocab, bias=False): stored (D, V_pad), zero-padded
        "w_nsp":     jnp.pad(nrm(keys[3], (d_model, vocab_size)),
                             ((0, 0), (0, v_pad - vocab_size))).astype(jnp.bfloat16),
        # proj_mlm = token_emb.weight.T, materialized once (tied), zero-padded
        "proj_mlm":  jnp.pad(token_emb.T,
                             ((0, 0), (0, v_pad - vocab_size))).astype(jnp.bfloat16),
        "layers": [],
    }
    for l in range(n_layers):
        ks = jax.random.split(keys[4 + l], 6)
        wq = nrm(ks[0], (d_model, d_model))
        wk = nrm(ks[1], (d_model, d_model))
        wv = nrm(ks[2], (d_model, d_model))
        params["layers"].append({
            "wqkv": jnp.concatenate([wq, wk, wv], axis=1).astype(jnp.bfloat16),
            "bqkv": jnp.zeros((3 * d_model,), jnp.float32),
            "wo": nrm(ks[3], (d_model, d_model)).astype(jnp.bfloat16),
            "bo": jnp.zeros((d_model,), jnp.float32),
            "w1": nrm(ks[4], (d_model, d_ff)).astype(jnp.bfloat16),
            "b1": jnp.zeros((d_ff,), jnp.float32),
            "w2": nrm(ks[5], (d_ff, d_model)).astype(jnp.bfloat16),
            "b2": jnp.zeros((d_model,), jnp.float32),
            "ln1_g": jnp.ones((d_model,), jnp.float32),
            "ln1_b": jnp.zeros((d_model,), jnp.float32),
            "ln2_g": jnp.ones((d_model,), jnp.float32),
            "ln2_b": jnp.zeros((d_model,), jnp.float32),
        })
    return params


def f_emb(params, input_ids, sep_token):
    """Token + positional + segment embedding (the injected `f_emb` module)."""
    B, S = input_ids.shape
    tok = jnp.take(params["token_emb"], input_ids, axis=0)          # (B, S, D)
    pos = params["pos_emb"][:S][None, :, :]                          # (1, S, D)
    is_sep = (input_ids == sep_token).astype(jnp.int32)
    # TODO(synk): segment-id convention depends on the injected f_emb; here
    # segment 0 runs through the first [SEP], segment 1 afterwards.
    seg_ids = jnp.clip(jnp.cumsum(is_sep, axis=1) - is_sep, 0, 1)
    seg = jnp.take(params["seg_emb"], seg_ids, axis=0)               # (B, S, D)
    return (tok + pos + seg).astype(jnp.float32)


def encoder_layer(x, neg_mask, p, n_heads):
    """x: (B, S, D) bf16, neg_mask: (B, 1, S) f32 additive attention mask."""
    B, S, D = x.shape
    x2 = x.reshape(B * S, D)
    # 1) fused QKV projection (one matmul instead of three)
    qkv = dense(x2, p["wqkv"], p["bqkv"], out_dtype=jnp.bfloat16)    # (B*S, 3D)
    # 2) per-(batch, head) attention, head-major layout, K pre-transposed
    ctx = mha_attention(qkv.reshape(B, S, 3 * D), neg_mask, n_heads, D)
    # 3) output projection fused with residual add + LayerNorm
    x2 = dense_add_layernorm(ctx.reshape(B * S, D), p["wo"], p["bo"],
                             x2, p["ln1_g"], p["ln1_b"])
    # 4) FFN (W1 + GELU + W2) fused with residual add + LayerNorm, F-tiled
    x2 = ffn_layernorm(x2, p["w1"], p["b1"], p["w2"], p["b2"],
                       x2, p["ln2_g"], p["ln2_b"])
    return x2.reshape(B, S, D)


def bert_forward(params, input_ids, input_mask, masked_positions, sep_token, n_heads):
    """Mirrors BERT.forward: returns (nsp_scores, mlm_scores)."""
    B, S = input_ids.shape
    V, D = params["token_emb"].shape

    # encode(): encoder(f_emb(input, sep_token), input_mask)
    x = f_emb(params, input_ids, sep_token).astype(jnp.bfloat16)
    # additive attention mask, computed once and reused in every layer
    neg_mask = ((1.0 - input_mask.astype(jnp.float32)) * (-1e9)).reshape(B, 1, S)
    for layer in params["layers"]:
        x = encoder_layer(x, neg_mask, layer, n_heads)
    encoder_out = x                                                  # (B, S, D)

    # nsp_scores = proj_nsp(encoder_out[:, 0])  -- Linear(d_model, vocab, no bias)
    # computed at padded vocab width, bf16 logits, sliced back to V
    cls = encoder_out[:, 0, :]                                       # (B, D)
    nsp_scores = dense(cls, params["w_nsp"], out_dtype=jnp.bfloat16)[:, :V]

    # torch.gather(encoder_out, dim=1, index=masked_positions expanded)
    NM = masked_positions.shape[1]
    idx = jnp.broadcast_to(masked_positions[:, :, None], (B, NM, D))
    encoder_preds = jnp.take_along_axis(encoder_out, idx, axis=1)    # (B, NM, D)

    # mlm_scores = encoder_preds @ proj_mlm  (proj_mlm = token_emb.weight.T)
    mlm_scores = dense(encoder_preds.reshape(B * NM, D), params["proj_mlm"],
                       out_dtype=jnp.bfloat16)[:, :V].reshape(B, NM, V)
    return nsp_scores, mlm_scores


# ----------------------------------------------------------------------------
# Main
# ----------------------------------------------------------------------------
if __name__ == "__main__":
    B, S, D, H, FF, V, L, NM = 2, 8, 32, 4, 64, 64, 2, 2
    sep_token = 3

    key = jax.random.PRNGKey(0)
    kp, ki, km = jax.random.split(key, 3)
    params = init_params(kp, vocab_size=V, d_model=D, d_ff=FF, n_layers=L, max_len=S)

    input_ids = jax.random.randint(ki, (B, S), 4, V, dtype=jnp.int32)
    input_ids = input_ids.at[:, S // 2].set(sep_token)               # a [SEP] per row
    input_mask = jnp.ones((B, S), jnp.float32).at[1, S - 1].set(0.0) # one padded position
    masked_positions = jax.random.randint(km, (B, NM), 1, S - 1, dtype=jnp.int32)

    fwd = jax.jit(functools.partial(bert_forward, sep_token=sep_token, n_heads=H))
    nsp_scores, mlm_scores = fwd(params, input_ids, input_mask, masked_positions)
    jax.block_until_ready((nsp_scores, mlm_scores))

    assert nsp_scores.shape == (B, V), nsp_scores.shape
    assert mlm_scores.shape == (B, NM, V), mlm_scores.shape
    assert bool(jnp.all(jnp.isfinite(nsp_scores.astype(jnp.float32))))
    assert bool(jnp.all(jnp.isfinite(mlm_scores.astype(jnp.float32))))
    print("KERNEL_OK")
</pallas_src>

<mosaic_0001>
module attributes {stable_mosaic.version = 11 : i64} {
  func.func @_dense_kernel(%arg0: i32, %arg1: i32, %arg2: i32, %arg3: memref<16x32xbf16, #tpu.memory_space<vmem>>, %arg4: memref<32x96xbf16, #tpu.memory_space<vmem>>, %arg5: memref<1x96xf32, #tpu.memory_space<vmem>>, %arg6: memref<16x96xbf16, #tpu.memory_space<vmem>>, %arg7: memref<16x96xf32, #tpu.memory_space<vmem>>) attributes {dimension_semantics = [#tpu.dimension_semantics<parallel>, #tpu.dimension_semantics<parallel>, #tpu.dimension_semantics<arbitrary>], iteration_bounds = array<i64: 1, 1, 1>, scalar_prefetch = 0 : i64, scratch_operands = 1 : i64, tpu.core_type = #tpu.core_type<tc>, window_params = [{transform_indices = @transform_0, window_bounds = array<i64: 16, 32>}, {transform_indices = @transform_1, window_bounds = array<i64: 32, 96>}, {transform_indices = @transform_2, window_bounds = array<i64: 1, 96>}, {transform_indices = @transform_3, window_bounds = array<i64: 16, 96>}]} {
    %c0_i32 = arith.constant 0 : i32
    %0 = arith.cmpi eq, %arg2, %c0_i32 : i32
    %1 = arith.extui %0 : i1 to i32
    %c0_i32_0 = arith.constant 0 : i32
    %2 = arith.cmpi ne, %1, %c0_i32_0 : i32
    scf.if %2 {
      %cst_10 = arith.constant 0.000000e+00 : f32
      %12 = vector.broadcast %cst_10 : f32 to vector<16x96xf32>
      %c0_11 = arith.constant 0 : index
      %c0_12 = arith.constant 0 : index
      %13 = vector.load %arg7[%c0_11, %c0_12] : memref<16x96xf32, #tpu.memory_space<vmem>>, vector<16x96xf32>
      tpu.vector_store %arg7[%c0_11, %c0_12], %12 {strides = array<i32>} : memref<16x96xf32, #tpu.memory_space<vmem>>, vector<16x96xf32>,
    } else {
    }
    %c0 = arith.constant 0 : index
    %c0_1 = arith.constant 0 : index
    %3 = vector.load %arg7[%c0, %c0_1] : memref<16x96xf32, #tpu.memory_space<vmem>>, vector<16x96xf32>
    %c0_2 = arith.constant 0 : index
    %c0_3 = arith.constant 0 : index
    %4 = vector.load %arg3[%c0_2, %c0_3] : memref<16x32xbf16, #tpu.memory_space<vmem>>, vector<16x32xbf16>
    %c0_4 = arith.constant 0 : index
    %c0_5 = arith.constant 0 : index
    %5 = vector.load %arg4[%c0_4, %c0_5] : memref<32x96xbf16, #tpu.memory_space<vmem>>, vector<32x96xbf16>
    %cst = arith.constant dense<0.000000e+00> : vector<16x96xf32>
    %6 = tpu.matmul %4, %5, %cst {dimension_numbers = #tpu.dot_dimension_numbers<[1], [0], [0], [1], [0, 0, 1, 1], [], []>} : vector<16x32xbf16>, vector<32x96xbf16>, vector<16x96xf32> -> vector<16x96xf32>
    %7 = arith.addf %3, %6 : vector<16x96xf32>
    %c0_6 = arith.constant 0 : index
    %c0_7 = arith.constant 0 : index
    %8 = vector.load %arg7[%c0_6, %c0_7] : memref<16x96xf32, #tpu.memory_space<vmem>>, vector<16x96xf32>
    tpu.vector_store %arg7[%c0_6, %c0_7], %7 {strides = array<i32>} : memref<16x96xf32, #tpu.memory_space<vmem>>, vector<16x96xf32>,
    %c0_i32_8 = arith.constant 0 : i32
    %9 = arith.cmpi eq, %arg2, %c0_i32_8 : i32
    %10 = arith.extui %9 : i1 to i32
    %c0_i32_9 = arith.constant 0 : i32
    %11 = arith.cmpi ne, %10, %c0_i32_9 : i32
    scf.if %11 {
      %c0_10 = arith.constant 0 : index
      %c0_11 = arith.constant 0 : index
      %12 = vector.load %arg7[%c0_10, %c0_11] : memref<16x96xf32, #tpu.memory_space<vmem>>, vector<16x96xf32>
      %c0_12 = arith.constant 0 : index
      %c0_13 = arith.constant 0 : index
      %13 = vector.load %arg5[%c0_12, %c0_13] : memref<1x96xf32, #tpu.memory_space<vmem>>, vector<1x96xf32>
      %14 = vector.broadcast %13 : vector<1x96xf32> to vector<16x96xf32>
      %15 = arith.addf %12, %14 : vector<16x96xf32>
      %16 = arith.truncf %15 : vector<16x96xf32> to vector<16x96xbf16>
      %c0_14 = arith.constant 0 : index
      %c0_15 = arith.constant 0 : index
      %17 = vector.load %arg6[%c0_14, %c0_15] : memref<16x96xbf16, #tpu.memory_space<vmem>>, vector<16x96xbf16>
      tpu.vector_store %arg6[%c0_14, %c0_15], %16 {strides = array<i32>} : memref<16x96xbf16, #tpu.memory_space<vmem>>, vector<16x96xbf16>,
    } else {
    }
    return
  }
  func.func @transform_0(%arg0: i32, %arg1: i32, %arg2: i32) -> (i32, i32) {
    %c0_i32 = arith.constant 0 : i32
    return %arg0, %arg2 : i32, i32
  }
  func.func @transform_1(%arg0: i32, %arg1: i32, %arg2: i32) -> (i32, i32) {
    %c0_i32 = arith.constant 0 : i32
    return %arg2, %arg1 : i32, i32
  }
  func.func @transform_2(%arg0: i32, %arg1: i32, %arg2: i32) -> (i32, i32) {
    %c0_i32 = arith.constant 0 : i32
    %c0_i32_0 = arith.constant 0 : i32
    return %c0_i32, %arg1 : i32, i32
  }
  func.func @transform_3(%arg0: i32, %arg1: i32, %arg2: i32) -> (i32, i32) {
    %c0_i32 = arith.constant 0 : i32
    return %arg0, %arg1 : i32, i32
  }
}

module attributes {stable_mosaic.version = 11 : i64} {
  func.func @_attn_kernel(%arg0: i32, %arg1: i32, %arg2: memref<1x1x8xf32, #tpu.memory_space<vmem>>, %arg3: memref<1x1x8x8xbf16, #tpu.memory_space<vmem>>, %arg4: memref<1x1x8x8xbf16, #tpu.memory_space<vmem>>, %arg5: memref<1x1x8x8xbf16, #tpu.memory_space<vmem>>, %arg6: memref<1x1x8x8xbf16, #tpu.memory_space<vmem>>) attributes {dimension_semantics = [#tpu.dimension_semantics<parallel>, #tpu.dimension_semantics<parallel>], iteration_bounds = array<i64: 2, 4>, scalar_prefetch = 0 : i64, scratch_operands = 0 : i64, tpu.core_type = #tpu.core_type<tc>, window_params = [{transform_indices = @transform_0, window_bounds = array<i64: 1, 1, 8>}, {transform_indices = @transform_1, window_bounds = array<i64: 1, 1, 8, 8>}, {transform_indices = @transform_2, window_bounds = array<i64: 1, 1, 8, 8>}, {transform_indices = @transform_3, window_bounds = array<i64: 1, 1, 8, 8>}, {transform_indices = @transform_4, window_bounds = array<i64: 1, 1, 8, 8>}]} {
    %c0 = arith.constant 0 : index
    %c0_0 = arith.constant 0 : index
    %c0_1 = arith.constant 0 : index
    %0 = vector.load %arg2[%c0, %c0_0, %c0_1] : memref<1x1x8xf32, #tpu.memory_space<vmem>>, vector<1x1x8xf32>
    %1 = vector.shape_cast %0 : vector<1x1x8xf32> to vector<1x8xf32>
    %c0_2 = arith.constant 0 : index
    %c0_3 = arith.constant 0 : index
    %c0_4 = arith.constant 0 : index
    %c0_5 = arith.constant 0 : index
    %2 = vector.load %arg3[%c0_2, %c0_3, %c0_4, %c0_5] : memref<1x1x8x8xbf16, #tpu.memory_space<vmem>>, vector<1x1x8x8xbf16>
    %3 = vector.shape_cast %2 : vector<1x1x8x8xbf16> to vector<8x8xbf16>
    %c0_6 = arith.constant 0 : index
    %c0_7 = arith.constant 0 : index
    %c0_8 = arith.constant 0 : index
    %c0_9 = arith.constant 0 : index
    %4 = vector.load %arg4[%c0_6, %c0_7, %c0_8, %c0_9] : memref<1x1x8x8xbf16, #tpu.memory_space<vmem>>, vector<1x1x8x8xbf16>
    %5 = vector.shape_cast %4 : vector<1x1x8x8xbf16> to vector<8x8xbf16>
    %c0_10 = arith.constant 0 : index
    %c0_11 = arith.constant 0 : index
    %c0_12 = arith.constant 0 : index
    %c0_13 = arith.constant 0 : index
    %6 = vector.load %arg5[%c0_10, %c0_11, %c0_12, %c0_13] : memref<1x1x8x8xbf16, #tpu.memory_space<vmem>>, vector<1x1x8x8xbf16>
    %7 = vector.shape_cast %6 : vector<1x1x8x8xbf16> to vector<8x8xbf16>
    %cst = arith.constant dense<0.000000e+00> : vector<8x8xf32>
    %8 = tpu.matmul %3, %5, %cst {dimension_numbers = #tpu.dot_dimension_numbers<[1], [0], [0], [1], [0, 0, 1, 1], [], []>} : vector<8x8xbf16>, vector<8x8xbf16>, vector<8x8xf32> -> vector<8x8xf32>
    %cst_14 = arith.constant 0.353553385 : f32
    %9 = vector.broadcast %cst_14 : f32 to vector<8x8xf32>
    %10 = arith.mulf %8, %9 : vector<8x8xf32>
    %11 = vector.broadcast %1 : vector<1x8xf32> to vector<8x8xf32>
    %12 = arith.addf %10, %11 : vector<8x8xf32>
    %cst_15 = arith.constant dense<0xFF800000> : vector<8xf32>
    %13 = vector.multi_reduction <maximumf>, %12, %cst_15 [1] : vector<8x8xf32> to vector<8xf32>
    %14 = vector.shape_cast %13 : vector<8xf32> to vector<8x1xf32>
    %15 = vector.broadcast %14 : vector<8x1xf32> to vector<8x8xf32>
    %16 = arith.subf %12, %15 : vector<8x8xf32>
    %17 = math.exp %16 : vector<8x8xf32>
    %cst_16 = arith.constant dense<0.000000e+00> : vector<8xf32>
    %18 = vector.multi_reduction <add>, %17, %cst_16 [1] : vector<8x8xf32> to vector<8xf32>
    %19 = vector.shape_cast %18 : vector<8xf32> to vector<8x1xf32>
    %20 = tpu.reciprocal %19 {approx = true} : vector<8x1xf32> -> vector<8x1xf32>
    %21 = vector.broadcast %20 : vector<8x1xf32> to vector<8x8xf32>
    %22 = arith.mulf %17, %21 : vector<8x8xf32>
    %23 = arith.truncf %22 : vector<8x8xf32> to vector<8x8xbf16>
    %cst_17 = arith.constant dense<0.000000e+00> : vector<8x8xf32>
    %24 = tpu.matmul %23, %7, %cst_17 {dimension_numbers = #tpu.dot_dimension_numbers<[1], [0], [0], [1], [0, 0, 1, 1], [], []>} : vector<8x8xbf16>, vector<8x8xbf16>, vector<8x8xf32> -> vector<8x8xf32>
    %25 = arith.truncf %24 : vector<8x8xf32> to vector<8x8xbf16>
    %c0_18 = arith.constant 0 : index
    %c0_19 = arith.constant 0 : index
    %c0_20 = arith.constant 0 : index
    %c0_21 = arith.constant 0 : index
    %26 = vector.load %arg6[%c0_18, %c0_19, %c0_20, %c0_21] : memref<1x1x8x8xbf16, #tpu.memory_space<vmem>>, vector<1x1x8x8xbf16>
    %27 = vector.shape_cast %26 : vector<1x1x8x8xbf16> to vector<8x8xbf16>
    %28 = vector.shape_cast %25 : vector<8x8xbf16> to vector<1x1x8x8xbf16>
    tpu.vector_store %arg6[%c0_18, %c0_19, %c0_20, %c0_21], %28 {strides = array<i32>} : memref<1x1x8x8xbf16, #tpu.memory_space<vmem>>, vector<1x1x8x8xbf16>,
    return
  }
  func.func @transform_0(%arg0: i32, %arg1: i32) -> (i32, i32, i32) {
    %c0_i32 = arith.constant 0 : i32
    %c0_i32_0 = arith.constant 0 : i32
    %c0_i32_1 = arith.constant 0 : i32
    return %arg0, %c0_i32, %c0_i32_0 : i32, i32, i32
  }
  func.func @transform_1(%arg0: i32, %arg1: i32) -> (i32, i32, i32, i32) {
    %c0_i32 = arith.constant 0 : i32
    %c0_i32_0 = arith.constant 0 : i32
    %c0_i32_1 = arith.constant 0 : i32
    return %arg0, %arg1, %c0_i32, %c0_i32_0 : i32, i32, i32, i32
  }
  func.func @transform_2(%arg0: i32, %arg1: i32) -> (i32, i32, i32, i32) {
    %c0_i32 = arith.constant 0 : i32
    %c0_i32_0 = arith.constant 0 : i32
    %c0_i32_1 = arith.constant 0 : i32
    return %arg0, %arg1, %c0_i32, %c0_i32_0 : i32, i32, i32, i32
  }
  func.func @transform_3(%arg0: i32, %arg1: i32) -> (i32, i32, i32, i32) {
    %c0_i32 = arith.constant 0 : i32
    %c0_i32_0 = arith.constant 0 : i32
    %c0_i32_1 = arith.constant 0 : i32
    return %arg0, %arg1, %c0_i32, %c0_i32_0 : i32, i32, i32, i32
  }
  func.func @transform_4(%arg0: i32, %arg1: i32) -> (i32, i32, i32, i32) {
    %c0_i32 = arith.constant 0 : i32
    %c0_i32_0 = arith.constant 0 : i32
    %c0_i32_1 = arith.constant 0 : i32
    return %arg0, %arg1, %c0_i32, %c0_i32_0 : i32, i32, i32, i32
  }
}

module attributes {stable_mosaic.version = 11 : i64} {
  func.func @_dense_add_ln_kernel(%arg0: i32, %arg1: memref<16x32xbf16, #tpu.memory_space<vmem>>, %arg2: memref<32x32xbf16, #tpu.memory_space<vmem>>, %arg3: memref<1x32xf32, #tpu.memory_space<vmem>>, %arg4: memref<16x32xbf16, #tpu.memory_space<vmem>>, %arg5: memref<1x32xf32, #tpu.memory_space<vmem>>, %arg6: memref<1x32xf32, #tpu.memory_space<vmem>>, %arg7: memref<16x32xbf16, #tpu.memory_space<vmem>>) attributes {dimension_semantics = [#tpu.dimension_semantics<parallel>], iteration_bounds = array<i64: 1>, scalar_prefetch = 0 : i64, scratch_operands = 0 : i64, tpu.core_type = #tpu.core_type<tc>, window_params = [{transform_indices = @transform_0, window_bounds = array<i64: 16, 32>}, {pipeline_mode = #tpu.pipeline_mode<synchronous>, transform_indices = @transform_1, window_bounds = array<i64: 32, 32>}, {pipeline_mode = #tpu.pipeline_mode<synchronous>, transform_indices = @transform_2, window_bounds = array<i64: 1, 32>}, {transform_indices = @transform_3, window_bounds = array<i64: 16, 32>}, {pipeline_mode = #tpu.pipeline_mode<synchronous>, transform_indices = @transform_4, window_bounds = array<i64: 1, 32>}, {pipeline_mode = #tpu.pipeline_mode<synchronous>, transform_indices = @transform_5, window_bounds = array<i64: 1, 32>}, {transform_indices = @transform_6, window_bounds = array<i64: 16, 32>}]} {
    %c0 = arith.constant 0 : index
    %c0_0 = arith.constant 0 : index
    %0 = vector.load %arg1[%c0, %c0_0] : memref<16x32xbf16, #tpu.memory_space<vmem>>, vector<16x32xbf16>
    %c0_1 = arith.constant 0 : index
    %c0_2 = arith.constant 0 : index
    %1 = vector.load %arg2[%c0_1, %c0_2] : memref<32x32xbf16, #tpu.memory_space<vmem>>, vector<32x32xbf16>
    %cst = arith.constant dense<0.000000e+00> : vector<16x32xf32>
    %2 = tpu.matmul %0, %1, %cst {dimension_numbers = #tpu.dot_dimension_numbers<[1], [0], [0], [1], [0, 0, 1, 1], [], []>} : vector<16x32xbf16>, vector<32x32xbf16>, vector<16x32xf32> -> vector<16x32xf32>
    %c0_3 = arith.constant 0 : index
    %c0_4 = arith.constant 0 : index
    %3 = vector.load %arg3[%c0_3, %c0_4] : memref<1x32xf32, #tpu.memory_space<vmem>>, vector<1x32xf32>
    %4 = vector.broadcast %3 : vector<1x32xf32> to vector<16x32xf32>
    %5 = arith.addf %2, %4 : vector<16x32xf32>
    %c0_5 = arith.constant 0 : index
    %c0_6 = arith.constant 0 : index
    %6 = vector.load %arg4[%c0_5, %c0_6] : memref<16x32xbf16, #tpu.memory_space<vmem>>, vector<16x32xbf16>
    %7 = arith.extf %6 : vector<16x32xbf16> to vector<16x32xf32>
    %8 = arith.addf %5, %7 : vector<16x32xf32>
    %cst_7 = arith.constant dense<0.000000e+00> : vector<16xf32>
    %9 = vector.multi_reduction <add>, %8, %cst_7 [1] : vector<16x32xf32> to vector<16xf32>
    %10 = vector.shape_cast %9 : vector<16xf32> to vector<16x1xf32>
    %cst_8 = arith.constant 3.200000e+01 : f32
    %11 = vector.broadcast %cst_8 : f32 to vector<16x1xf32>
    %12 = arith.divf %10, %11 : vector<16x1xf32>
    %13 = vector.broadcast %12 : vector<16x1xf32> to vector<16x32xf32>
    %14 = arith.subf %8, %13 : vector<16x32xf32>
    %15 = arith.mulf %14, %14 : vector<16x32xf32>
    %cst_9 = arith.constant dense<0.000000e+00> : vector<16xf32>
    %16 = vector.multi_reduction <add>, %15, %cst_9 [1] : vector<16x32xf32> to vector<16xf32>
    %17 = vector.shape_cast %16 : vector<16xf32> to vector<16x1xf32>
    %cst_10 = arith.constant 3.200000e+01 : f32
    %18 = vector.broadcast %cst_10 : f32 to vector<16x1xf32>
    %19 = arith.divf %17, %18 : vector<16x1xf32>
    %20 = vector.broadcast %12 : vector<16x1xf32> to vector<16x32xf32>
    %21 = arith.subf %8, %20 : vector<16x32xf32>
    %cst_11 = arith.constant 9.99999974E-6 : f32
    %22 = vector.broadcast %cst_11 : f32 to vector<16x1xf32>
    %23 = arith.addf %19, %22 : vector<16x1xf32>
    %24 = math.rsqrt %23 : vector<16x1xf32>
    %25 = vector.broadcast %24 : vector<16x1xf32> to vector<16x32xf32>
    %26 = arith.mulf %21, %25 : vector<16x32xf32>
    %c0_12 = arith.constant 0 : index
    %c0_13 = arith.constant 0 : index
    %27 = vector.load %arg5[%c0_12, %c0_13] : memref<1x32xf32, #tpu.memory_space<vmem>>, vector<1x32xf32>
    %28 = vector.broadcast %27 : vector<1x32xf32> to vector<16x32xf32>
    %29 = arith.mulf %26, %28 : vector<16x32xf32>
    %c0_14 = arith.constant 0 : index
    %c0_15 = arith.constant 0 : index
    %30 = vector.load %arg6[%c0_14, %c0_15] : memref<1x32xf32, #tpu.memory_space<vmem>>, vector<1x32xf32>
    %31 = vector.broadcast %30 : vector<1x32xf32> to vector<16x32xf32>
    %32 = arith.addf %29, %31 : vector<16x32xf32>
    %33 = arith.truncf %32 : vector<16x32xf32> to vector<16x32xbf16>
    %c0_16 = arith.constant 0 : index
    %c0_17 = arith.constant 0 : index
    %34 = vector.load %arg7[%c0_16, %c0_17] : memref<16x32xbf16, #tpu.memory_space<vmem>>, vector<16x32xbf16>
    tpu.vector_store %arg7[%c0_16, %c0_17], %33 {strides = array<i32>} : memref<16x32xbf16, #tpu.memory_space<vmem>>, vector<16x32xbf16>,
    return
  }
  func.func @transform_0(%arg0: i32) -> (i32, i32) {
    %c0_i32 = arith.constant 0 : i32
    %c0_i32_0 = arith.constant 0 : i32
    return %arg0, %c0_i32 : i32, i32
  }
  func.func @transform_1(%arg0: i32) -> (i32, i32) {
    %c0_i32 = arith.constant 0 : i32
    %c0_i32_0 = arith.constant 0 : i32
    %c0_i32_1 = arith.constant 0 : i32
    return %c0_i32, %c0_i32_0 : i32, i32
  }
  func.func @transform_2(%arg0: i32) -> (i32, i32) {
    %c0_i32 = arith.constant 0 : i32
    %c0_i32_0 = arith.constant 0 : i32
    %c0_i32_1 = arith.constant 0 : i32
    return %c0_i32, %c0_i32_0 : i32, i32
  }
  func.func @transform_3(%arg0: i32) -> (i32, i32) {
    %c0_i32 = arith.constant 0 : i32
    %c0_i32_0 = arith.constant 0 : i32
    return %arg0, %c0_i32 : i32, i32
  }
  func.func @transform_4(%arg0: i32) -> (i32, i32) {
    %c0_i32 = arith.constant 0 : i32
    %c0_i32_0 = arith.constant 0 : i32
    %c0_i32_1 = arith.constant 0 : i32
    return %c0_i32, %c0_i32_0 : i32, i32
  }
  func.func @transform_5(%arg0: i32) -> (i32, i32) {
    %c0_i32 = arith.constant 0 : i32
    %c0_i32_0 = arith.constant 0 : i32
    %c0_i32_1 = arith.constant 0 : i32
    return %c0_i32, %c0_i32_0 : i32, i32
  }
  func.func @transform_6(%arg0: i32) -> (i32, i32) {
    %c0_i32 = arith.constant 0 : i32
    %c0_i32_0 = arith.constant 0 : i32
    return %arg0, %c0_i32 : i32, i32
  }
}

module attributes {stable_mosaic.version = 11 : i64} {
  func.func @_ffn_ln_kernel(%arg0: i32, %arg1: i32, %arg2: memref<16x32xbf16, #tpu.memory_space<vmem>>, %arg3: memref<32x64xbf16, #tpu.memory_space<vmem>>, %arg4: memref<1x64xf32, #tpu.memory_space<vmem>>, %arg5: memref<64x32xbf16, #tpu.memory_space<vmem>>, %arg6: memref<1x32xf32, #tpu.memory_space<vmem>>, %arg7: memref<16x32xbf16, #tpu.memory_space<vmem>>, %arg8: memref<1x32xf32, #tpu.memory_space<vmem>>, %arg9: memref<1x32xf32, #tpu.memory_space<vmem>>, %arg10: memref<16x32xbf16, #tpu.memory_space<vmem>>, %arg11: memref<16x32xf32, #tpu.memory_space<vmem>>) attributes {dimension_semantics = [#tpu.dimension_semantics<parallel>, #tpu.dimension_semantics<arbitrary>], iteration_bounds = array<i64: 1, 1>, scalar_prefetch = 0 : i64, scratch_operands = 1 : i64, tpu.core_type = #tpu.core_type<tc>, window_params = [{transform_indices = @transform_0, window_bounds = array<i64: 16, 32>}, {transform_indices = @transform_1, window_bounds = array<i64: 32, 64>}, {transform_indices = @transform_2, window_bounds = array<i64: 1, 64>}, {transform_indices = @transform_3, window_bounds = array<i64: 64, 32>}, {pipeline_mode = #tpu.pipeline_mode<synchronous>, transform_indices = @transform_4, window_bounds = array<i64: 1, 32>}, {transform_indices = @transform_5, window_bounds = array<i64: 16, 32>}, {pipeline_mode = #tpu.pipeline_mode<synchronous>, transform_indices = @transform_6, window_bounds = array<i64: 1, 32>}, {pipeline_mode = #tpu.pipeline_mode<synchronous>, transform_indices = @transform_7, window_bounds = array<i64: 1, 32>}, {transform_indices = @transform_8, window_bounds = array<i64: 16, 32>}]} {
    %c0_i32 = arith.constant 0 : i32
    %0 = arith.cmpi eq, %arg1, %c0_i32 : i32
    %1 = arith.extui %0 : i1 to i32
    %c0_i32_0 = arith.constant 0 : i32
    %2 = arith.cmpi ne, %1, %c0_i32_0 : i32
    scf.if %2 {
      %cst_19 = arith.constant 0.000000e+00 : f32
      %31 = vector.broadcast %cst_19 : f32 to vector<16x32xf32>
      %c0_20 = arith.constant 0 : index
      %c0_21 = arith.constant 0 : index
      %32 = vector.load %arg11[%c0_20, %c0_21] : memref<16x32xf32, #tpu.memory_space<vmem>>, vector<16x32xf32>
      tpu.vector_store %arg11[%c0_20, %c0_21], %31 {strides = array<i32>} : memref<16x32xf32, #tpu.memory_space<vmem>>, vector<16x32xf32>,
    } else {
    }
    %c0 = arith.constant 0 : index
    %c0_1 = arith.constant 0 : index
    %3 = vector.load %arg2[%c0, %c0_1] : memref<16x32xbf16, #tpu.memory_space<vmem>>, vector<16x32xbf16>
    %c0_2 = arith.constant 0 : index
    %c0_3 = arith.constant 0 : index
    %4 = vector.load %arg3[%c0_2, %c0_3] : memref<32x64xbf16, #tpu.memory_space<vmem>>, vector<32x64xbf16>
    %cst = arith.constant dense<0.000000e+00> : vector<16x64xf32>
    %5 = tpu.matmul %3, %4, %cst {dimension_numbers = #tpu.dot_dimension_numbers<[1], [0], [0], [1], [0, 0, 1, 1], [], []>} : vector<16x32xbf16>, vector<32x64xbf16>, vector<16x64xf32> -> vector<16x64xf32>
    %c0_4 = arith.constant 0 : index
    %c0_5 = arith.constant 0 : index
    %6 = vector.load %arg4[%c0_4, %c0_5] : memref<1x64xf32, #tpu.memory_space<vmem>>, vector<1x64xf32>
    %7 = vector.broadcast %6 : vector<1x64xf32> to vector<16x64xf32>
    %8 = arith.addf %5, %7 : vector<16x64xf32>
    %9 = arith.truncf %8 : vector<16x64xf32> to vector<16x64xbf16>
    %cst_6 = arith.constant 5.000000e-01 : bf16
    %10 = vector.broadcast %cst_6 : bf16 to vector<16x64xbf16>
    %11 = arith.mulf %10, %9 : vector<16x64xbf16>
    %cst_7 = arith.constant 4.467770e-02 : bf16
    %12 = vector.broadcast %cst_7 : bf16 to vector<16x64xbf16>
    %13 = arith.mulf %12, %9 : vector<16x64xbf16>
    %14 = arith.mulf %13, %9 : vector<16x64xbf16>
    %15 = arith.mulf %14, %9 : vector<16x64xbf16>
    %16 = arith.addf %9, %15 : vector<16x64xbf16>
    %cst_8 = arith.constant 7.968750e-01 : bf16
    %17 = vector.broadcast %cst_8 : bf16 to vector<16x64xbf16>
    %18 = arith.mulf %17, %16 : vector<16x64xbf16>
    %19 = math.tanh %18 : vector<16x64xbf16>
    %cst_9 = arith.constant 1.000000e+00 : bf16
    %20 = vector.broadcast %cst_9 : bf16 to vector<16x64xbf16>
    %21 = arith.addf %20, %19 : vector<16x64xbf16>
    %22 = arith.mulf %11, %21 : vector<16x64xbf16>
    %c0_10 = arith.constant 0 : index
    %c0_11 = arith.constant 0 : index
    %23 = vector.load %arg11[%c0_10, %c0_11] : memref<16x32xf32, #tpu.memory_space<vmem>>, vector<16x32xf32>
    %c0_12 = arith.constant 0 : index
    %c0_13 = arith.constant 0 : index
    %24 = vector.load %arg5[%c0_12, %c0_13] : memref<64x32xbf16, #tpu.memory_space<vmem>>, vector<64x32xbf16>
    %cst_14 = arith.constant dense<0.000000e+00> : vector<16x32xf32>
    %25 = tpu.matmul %22, %24, %cst_14 {dimension_numbers = #tpu.dot_dimension_numbers<[1], [0], [0], [1], [0, 0, 1, 1], [], []>} : vector<16x64xbf16>, vector<64x32xbf16>, vector<16x32xf32> -> vector<16x32xf32>
    %26 = arith.addf %23, %25 : vector<16x32xf32>
    %c0_15 = arith.constant 0 : index
    %c0_16 = arith.constant 0 : index
    %27 = vector.load %arg11[%c0_15, %c0_16] : memref<16x32xf32, #tpu.memory_space<vmem>>, vector<16x32xf32>
    tpu.vector_store %arg11[%c0_15, %c0_16], %26 {strides = array<i32>} : memref<16x32xf32, #tpu.memory_space<vmem>>, vector<16x32xf32>,
    %c0_i32_17 = arith.constant 0 : i32
    %28 = arith.cmpi eq, %arg1, %c0_i32_17 : i32
    %29 = arith.extui %28 : i1 to i32
    %c0_i32_18 = arith.constant 0 : i32
    %30 = arith.cmpi ne, %29, %c0_i32_18 : i32
    scf.if %30 {
      %c0_19 = arith.constant 0 : index
      %c0_20 = arith.constant 0 : index
      %31 = vector.load %arg11[%c0_19, %c0_20] : memref<16x32xf32, #tpu.memory_space<vmem>>, vector<16x32xf32>
      %c0_21 = arith.constant 0 : index
      %c0_22 = arith.constant 0 : index
      %32 = vector.load %arg6[%c0_21, %c0_22] : memref<1x32xf32, #tpu.memory_space<vmem>>, vector<1x32xf32>
      %33 = vector.broadcast %32 : vector<1x32xf32> to vector<16x32xf32>
      %34 = arith.addf %31, %33 : vector<16x32xf32>
      %c0_23 = arith.constant 0 : index
      %c0_24 = arith.constant 0 : index
      %35 = vector.load %arg7[%c0_23, %c0_24] : memref<16x32xbf16, #tpu.memory_space<vmem>>, vector<16x32xbf16>
      %36 = arith.extf %35 : vector<16x32xbf16> to vector<16x32xf32>
      %37 = arith.addf %34, %36 : vector<16x32xf32>
      %cst_25 = arith.constant dense<0.000000e+00> : vector<16xf32>
      %38 = vector.multi_reduction <add>, %37, %cst_25 [1] : vector<16x32xf32> to vector<16xf32>
      %39 = vector.shape_cast %38 : vector<16xf32> to vector<16x1xf32>
      %cst_26 = arith.constant 3.200000e+01 : f32
      %40 = vector.broadcast %cst_26 : f32 to vector<16x1xf32>
      %41 = arith.divf %39, %40 : vector<16x1xf32>
      %42 = vector.broadcast %41 : vector<16x1xf32> to vector<16x32xf32>
      %43 = arith.subf %37, %42 : vector<16x32xf32>
      %44 = arith.mulf %43, %43 : vector<16x32xf32>
      %cst_27 = arith.constant dense<0.000000e+00> : vector<16xf32>
      %45 = vector.multi_reduction <add>, %44, %cst_27 [1] : vector<16x32xf32> to vector<16xf32>
      %46 = vector.shape_cast %45 : vector<16xf32> to vector<16x1xf32>
      %cst_28 = arith.constant 3.200000e+01 : f32
      %47 = vector.broadcast %cst_28 : f32 to vector<16x1xf32>
      %48 = arith.divf %46, %47 : vector<16x1xf32>
      %49 = vector.broadcast %41 : vector<16x1xf32> to vector<16x32xf32>
      %50 = arith.subf %37, %49 : vector<16x32xf32>
      %cst_29 = arith.constant 9.99999974E-6 : f32
      %51 = vector.broadcast %cst_29 : f32 to vector<16x1xf32>
      %52 = arith.addf %48, %51 : vector<16x1xf32>
      %53 = math.rsqrt %52 : vector<16x1xf32>
      %54 = vector.broadcast %53 : vector<16x1xf32> to vector<16x32xf32>
      %55 = arith.mulf %50, %54 : vector<16x32xf32>
      %c0_30 = arith.constant 0 : index
      %c0_31 = arith.constant 0 : index
      %56 = vector.load %arg8[%c0_30, %c0_31] : memref<1x32xf32, #tpu.memory_space<vmem>>, vector<1x32xf32>
      %57 = vector.broadcast %56 : vector<1x32xf32> to vector<16x32xf32>
      %58 = arith.mulf %55, %57 : vector<16x32xf32>
      %c0_32 = arith.constant 0 : index
      %c0_33 = arith.constant 0 : index
      %59 = vector.load %arg9[%c0_32, %c0_33] : memref<1x32xf32, #tpu.memory_space<vmem>>, vector<1x32xf32>
      %60 = vector.broadcast %59 : vector<1x32xf32> to vector<16x32xf32>
      %61 = arith.addf %58, %60 : vector<16x32xf32>
      %62 = arith.truncf %61 : vector<16x32xf32> to vector<16x32xbf16>
      %c0_34 = arith.constant 0 : index
      %c0_35 = arith.constant 0 : index
      %63 = vector.load %arg10[%c0_34, %c0_35] : memref<16x32xbf16, #tpu.memory_space<vmem>>, vector<16x32xbf16>
      tpu.vector_store %arg10[%c0_34, %c0_35], %62 {strides = array<i32>} : memref<16x32xbf16, #tpu.memory_space<vmem>>, vector<16x32xbf16>,
    } else {
    }
    return
  }
  func.func @transform_0(%arg0: i32, %arg1: i32) -> (i32, i32) {
    %c0_i32 = arith.constant 0 : i32
    %c0_i32_0 = arith.constant 0 : i32
    return %arg0, %c0_i32 : i32, i32
  }
  func.func @transform_1(%arg0: i32, %arg1: i32) -> (i32, i32) {
    %c0_i32 = arith.constant 0 : i32
    %c0_i32_0 = arith.constant 0 : i32
    return %c0_i32, %arg1 : i32, i32
  }
  func.func @transform_2(%arg0: i32, %arg1: i32) -> (i32, i32) {
    %c0_i32 = arith.constant 0 : i32
    %c0_i32_0 = arith.constant 0 : i32
    return %c0_i32, %arg1 : i32, i32
  }
  func.func @transform_3(%arg0: i32, %arg1: i32) -> (i32, i32) {
    %c0_i32 = arith.constant 0 : i32
    %c0_i32_0 = arith.constant 0 : i32
    return %arg1, %c0_i32 : i32, i32
  }
  func.func @transform_4(%arg0: i32, %arg1: i32) -> (i32, i32) {
    %c0_i32 = arith.constant 0 : i32
    %c0_i32_0 = arith.constant 0 : i32
    %c0_i32_1 = arith.constant 0 : i32
    return %c0_i32, %c0_i32_0 : i32, i32
  }
  func.func @transform_5(%arg0: i32, %arg1: i32) -> (i32, i32) {
    %c0_i32 = arith.constant 0 : i32
    %c0_i32_0 = arith.constant 0 : i32
    return %arg0, %c0_i32 : i32, i32
  }
  func.func @transform_6(%arg0: i32, %arg1: i32) -> (i32, i32) {
    %c0_i32 = arith.constant 0 : i32
    %c0_i32_0 = arith.constant 0 : i32
    %c0_i32_1 = arith.constant 0 : i32
    return %c0_i32, %c0_i32_0 : i32, i32
  }
  func.func @transform_7(%arg0: i32, %arg1: i32) -> (i32, i32) {
    %c0_i32 = arith.constant 0 : i32
    %c0_i32_0 = arith.constant 0 : i32
    %c0_i32_1 = arith.constant 0 : i32
    return %c0_i32, %c0_i32_0 : i32, i32
  }
  func.func @transform_8(%arg0: i32, %arg1: i32) -> (i32, i32) {
    %c0_i32 = arith.constant 0 : i32
    %c0_i32_0 = arith.constant 0 : i32
    return %arg0, %c0_i32 : i32, i32
  }
}

module attributes {stable_mosaic.version = 11 : i64} {
  func.func @_dense_kernel(%arg0: i32, %arg1: i32, %arg2: i32, %arg3: memref<4x32xbf16, #tpu.memory_space<vmem>>, %arg4: memref<32x128xbf16, #tpu.memory_space<vmem>>, %arg5: memref<1x128xf32, #tpu.memory_space<vmem>>, %arg6: memref<4x128xbf16, #tpu.memory_space<vmem>>, %arg7: memref<4x128xf32, #tpu.memory_space<vmem>>) attributes {dimension_semantics = [#tpu.dimension_semantics<parallel>, #tpu.dimension_semantics<parallel>, #tpu.dimension_semantics<arbitrary>], iteration_bounds = array<i64: 1, 1, 1>, scalar_prefetch = 0 : i64, scratch_operands = 1 : i64, tpu.core_type = #tpu.core_type<tc>, window_params = [{transform_indices = @transform_0, window_bounds = array<i64: 4, 32>}, {transform_indices = @transform_1, window_bounds = array<i64: 32, 128>}, {transform_indices = @transform_2, window_bounds = array<i64: 1, 128>}, {transform_indices = @transform_3, window_bounds = array<i64: 4, 128>}]} {
    %c0_i32 = arith.constant 0 : i32
    %0 = arith.cmpi eq, %arg2, %c0_i32 : i32
    %1 = arith.extui %0 : i1 to i32
    %c0_i32_0 = arith.constant 0 : i32
    %2 = arith.cmpi ne, %1, %c0_i32_0 : i32
    scf.if %2 {
      %cst_10 = arith.constant 0.000000e+00 : f32
      %12 = vector.broadcast %cst_10 : f32 to vector<4x128xf32>
      %c0_11 = arith.constant 0 : index
      %c0_12 = arith.constant 0 : index
      %13 = vector.load %arg7[%c0_11, %c0_12] : memref<4x128xf32, #tpu.memory_space<vmem>>, vector<4x128xf32>
      tpu.vector_store %arg7[%c0_11, %c0_12], %12 {strides = array<i32>} : memref<4x128xf32, #tpu.memory_space<vmem>>, vector<4x128xf32>,
    } else {
    }
    %c0 = arith.constant 0 : index
    %c0_1 = arith.constant 0 : index
    %3 = vector.load %arg7[%c0, %c0_1] : memref<4x128xf32, #tpu.memory_space<vmem>>, vector<4x128xf32>
    %c0_2 = arith.constant 0 : index
    %c0_3 = arith.constant 0 : index
    %4 = vector.load %arg3[%c0_2, %c0_3] : memref<4x32xbf16, #tpu.memory_space<vmem>>, vector<4x32xbf16>
    %c0_4 = arith.constant 0 : index
    %c0_5 = arith.constant 0 : index
    %5 = vector.load %arg4[%c0_4, %c0_5] : memref<32x128xbf16, #tpu.memory_space<vmem>>, vector<32x128xbf16>
    %cst = arith.constant dense<0.000000e+00> : vector<4x128xf32>
    %6 = tpu.matmul %4, %5, %cst {dimension_numbers = #tpu.dot_dimension_numbers<[1], [0], [0], [1], [0, 0, 1, 1], [], []>} : vector<4x32xbf16>, vector<32x128xbf16>, vector<4x128xf32> -> vector<4x128xf32>
    %7 = arith.addf %3, %6 : vector<4x128xf32>
    %c0_6 = arith.constant 0 : index
    %c0_7 = arith.constant 0 : index
    %8 = vector.load %arg7[%c0_6, %c0_7] : memref<4x128xf32, #tpu.memory_space<vmem>>, vector<4x128xf32>
    tpu.vector_store %arg7[%c0_6, %c0_7], %7 {strides = array<i32>} : memref<4x128xf32, #tpu.memory_space<vmem>>, vector<4x128xf32>,
    %c0_i32_8 = arith.constant 0 : i32
    %9 = arith.cmpi eq, %arg2, %c0_i32_8 : i32
    %10 = arith.extui %9 : i1 to i32
    %c0_i32_9 = arith.constant 0 : i32
    %11 = arith.cmpi ne, %10, %c0_i32_9 : i32
    scf.if %11 {
      %c0_10 = arith.constant 0 : index
      %c0_11 = arith.constant 0 : index
      %12 = vector.load %arg7[%c0_10, %c0_11] : memref<4x128xf32, #tpu.memory_space<vmem>>, vector<4x128xf32>
      %c0_12 = arith.constant 0 : index
      %c0_13 = arith.constant 0 : index
      %13 = vector.load %arg5[%c0_12, %c0_13] : memref<1x128xf32, #tpu.memory_space<vmem>>, vector<1x128xf32>
      %14 = vector.broadcast %13 : vector<1x128xf32> to vector<4x128xf32>
      %15 = arith.addf %12, %14 : vector<4x128xf32>
      %16 = arith.truncf %15 : vector<4x128xf32> to vector<4x128xbf16>
      %c0_14 = arith.constant 0 : index
      %c0_15 = arith.constant 0 : index
      %17 = vector.load %arg6[%c0_14, %c0_15] : memref<4x128xbf16, #tpu.memory_space<vmem>>, vector<4x128xbf16>
      tpu.vector_store %arg6[%c0_14, %c0_15], %16 {strides = array<i32>} : memref<4x128xbf16, #tpu.memory_space<vmem>>, vector<4x128xbf16>,
    } else {
    }
    return
  }
  func.func @transform_0(%arg0: i32, %arg1: i32, %arg2: i32) -> (i32, i32) {
    %c0_i32 = arith.constant 0 : i32
    return %arg0, %arg2 : i32, i32
  }
  func.func @transform_1(%arg0: i32, %arg1: i32, %arg2: i32) -> (i32, i32) {
    %c0_i32 = arith.constant 0 : i32
    return %arg2, %arg1 : i32, i32
  }
  func.func @transform_2(%arg0: i32, %arg1: i32, %arg2: i32) -> (i32, i32) {
    %c0_i32 = arith.constant 0 : i32
    %c0_i32_0 = arith.constant 0 : i32
    return %c0_i32, %arg1 : i32, i32
  }
  func.func @transform_3(%arg0: i32, %arg1: i32, %arg2: i32) -> (i32, i32) {
    %c0_i32 = arith.constant 0 : i32
    return %arg0, %arg1 : i32, i32
  }
}

module attributes {stable_mosaic.version = 11 : i64} {
  func.func @_dense_kernel(%arg0: i32, %arg1: i32, %arg2: i32, %arg3: memref<2x32xbf16, #tpu.memory_space<vmem>>, %arg4: memref<32x128xbf16, #tpu.memory_space<vmem>>, %arg5: memref<1x128xf32, #tpu.memory_space<vmem>>, %arg6: memref<2x128xbf16, #tpu.memory_space<vmem>>, %arg7: memref<2x128xf32, #tpu.memory_space<vmem>>) attributes {dimension_semantics = [#tpu.dimension_semantics<parallel>, #tpu.dimension_semantics<parallel>, #tpu.dimension_semantics<arbitrary>], iteration_bounds = array<i64: 1, 1, 1>, scalar_prefetch = 0 : i64, scratch_operands = 1 : i64, tpu.core_type = #tpu.core_type<tc>, window_params = [{transform_indices = @transform_0, window_bounds = array<i64: 2, 32>}, {transform_indices = @transform_1, window_bounds = array<i64: 32, 128>}, {transform_indices = @transform_2, window_bounds = array<i64: 1, 128>}, {transform_indices = @transform_3, window_bounds = array<i64: 2, 128>}]} {
    %c0_i32 = arith.constant 0 : i32
    %0 = arith.cmpi eq, %arg2, %c0_i32 : i32
    %1 = arith.extui %0 : i1 to i32
    %c0_i32_0 = arith.constant 0 : i32
    %2 = arith.cmpi ne, %1, %c0_i32_0 : i32
    scf.if %2 {
      %cst_10 = arith.constant 0.000000e+00 : f32
      %12 = vector.broadcast %cst_10 : f32 to vector<2x128xf32>
      %c0_11 = arith.constant 0 : index
      %c0_12 = arith.constant 0 : index
      %13 = vector.load %arg7[%c0_11, %c0_12] : memref<2x128xf32, #tpu.memory_space<vmem>>, vector<2x128xf32>
      tpu.vector_store %arg7[%c0_11, %c0_12], %12 {strides = array<i32>} : memref<2x128xf32, #tpu.memory_space<vmem>>, vector<2x128xf32>,
    } else {
    }
    %c0 = arith.constant 0 : index
    %c0_1 = arith.constant 0 : index
    %3 = vector.load %arg7[%c0, %c0_1] : memref<2x128xf32, #tpu.memory_space<vmem>>, vector<2x128xf32>
    %c0_2 = arith.constant 0 : index
    %c0_3 = arith.constant 0 : index
    %4 = vector.load %arg3[%c0_2, %c0_3] : memref<2x32xbf16, #tpu.memory_space<vmem>>, vector<2x32xbf16>
    %c0_4 = arith.constant 0 : index
    %c0_5 = arith.constant 0 : index
    %5 = vector.load %arg4[%c0_4, %c0_5] : memref<32x128xbf16, #tpu.memory_space<vmem>>, vector<32x128xbf16>
    %cst = arith.constant dense<0.000000e+00> : vector<2x128xf32>
    %6 = tpu.matmul %4, %5, %cst {dimension_numbers = #tpu.dot_dimension_numbers<[1], [0], [0], [1], [0, 0, 1, 1], [], []>} : vector<2x32xbf16>, vector<32x128xbf16>, vector<2x128xf32> -> vector<2x128xf32>
    %7 = arith.addf %3, %6 : vector<2x128xf32>
    %c0_6 = arith.constant 0 : index
    %c0_7 = arith.constant 0 : index
    %8 = vector.load %arg7[%c0_6, %c0_7] : memref<2x128xf32, #tpu.memory_space<vmem>>, vector<2x128xf32>
    tpu.vector_store %arg7[%c0_6, %c0_7], %7 {strides = array<i32>} : memref<2x128xf32, #tpu.memory_space<vmem>>, vector<2x128xf32>,
    %c0_i32_8 = arith.constant 0 : i32
    %9 = arith.cmpi eq, %arg2, %c0_i32_8 : i32
    %10 = arith.extui %9 : i1 to i32
    %c0_i32_9 = arith.constant 0 : i32
    %11 = arith.cmpi ne, %10, %c0_i32_9 : i32
    scf.if %11 {
      %c0_10 = arith.constant 0 : index
      %c0_11 = arith.constant 0 : index
      %12 = vector.load %arg7[%c0_10, %c0_11] : memref<2x128xf32, #tpu.memory_space<vmem>>, vector<2x128xf32>
      %c0_12 = arith.constant 0 : index
      %c0_13 = arith.constant 0 : index
      %13 = vector.load %arg5[%c0_12, %c0_13] : memref<1x128xf32, #tpu.memory_space<vmem>>, vector<1x128xf32>
      %14 = vector.broadcast %13 : vector<1x128xf32> to vector<2x128xf32>
      %15 = arith.addf %12, %14 : vector<2x128xf32>
      %16 = arith.truncf %15 : vector<2x128xf32> to vector<2x128xbf16>
      %c0_14 = arith.constant 0 : index
      %c0_15 = arith.constant 0 : index
      %17 = vector.load %arg6[%c0_14, %c0_15] : memref<2x128xbf16, #tpu.memory_space<vmem>>, vector<2x128xbf16>
      tpu.vector_store %arg6[%c0_14, %c0_15], %16 {strides = array<i32>} : memref<2x128xbf16, #tpu.memory_space<vmem>>, vector<2x128xbf16>,
    } else {
    }
    return
  }
  func.func @transform_0(%arg0: i32, %arg1: i32, %arg2: i32) -> (i32, i32) {
    %c0_i32 = arith.constant 0 : i32
    return %arg0, %arg2 : i32, i32
  }
  func.func @transform_1(%arg0: i32, %arg1: i32, %arg2: i32) -> (i32, i32) {
    %c0_i32 = arith.constant 0 : i32
    return %arg2, %arg1 : i32, i32
  }
  func.func @transform_2(%arg0: i32, %arg1: i32, %arg2: i32) -> (i32, i32) {
    %c0_i32 = arith.constant 0 : i32
    %c0_i32_0 = arith.constant 0 : i32
    return %c0_i32, %arg1 : i32, i32
  }
  func.func @transform_3(%arg0: i32, %arg1: i32, %arg2: i32) -> (i32, i32) {
    %c0_i32 = arith.constant 0 : i32
    return %arg0, %arg1 : i32, i32
  }
}

</mosaic_0001>

<llo_original>
// kernel: bert_forward.10
$region0: #{bert_forward.10}
  #allocation0 [shape = 'u32[]', space=smem, size = 0x4, offset = 0x4, fixed_abs, tag = 'smem constant byte address 0x4 - core index']
  #allocation1 [shape = 'u32[72,128]{1,0:T(1,128)}', space=vmem, size = 0x9000, scoped, tag = 'internal scratch']
  #allocation2 [shape = 'f32[16,96]{1,0:T(8,128)}', space=vmem, size = 0x2000, scoped, tag = 'scratch operand']
  %s0 = inlined_call_operand.vmem [shape: bf16[16,32], index: 0, kind: input, shape index: {}]
  %s1 = inlined_call_operand.vmem [shape: bf16[32,96], index: 1, kind: input, shape index: {}]
  %s2 = inlined_call_operand.vmem [shape: f32[1,96], index: 2, kind: input, shape index: {}]
  %s3 = inlined_call_operand.vmem [shape: bf16[16,96], index: 3, kind: output, shape index: {}]
  %s4 = sld [smem:[#allocation0]]
  $region30: #{bert_forward.10} parent=0
    _
  %s6 = ssub.s32 1, %s4
  %s7 = scalar_select 0, %s6, %s4
  // Predicated region
  $region2: #{bert_forward.10} parent=0 // pred_check
    _
  $region3: #{bert_forward.10} parent=0 // pred_check_branch
    %9 = sbr.rel (0) target = $region5
  $region4: #{bert_forward.10} parent=0 // pred_region
    _
  $region5: #{bert_forward.10} parent=0 // pred_fallthru
    _
  // Predicated region
  $region6: #{bert_forward.10} parent=0 // pred_check
    _
  $region7: #{bert_forward.10} parent=0 // pred_check_branch
    %11 = sbr.rel (0) target = $region9
  $region8: #{bert_forward.10} parent=0 // pred_region
    _
  $region9: #{bert_forward.10} parent=0 // pred_fallthru
    _
  // Predicated region
  $region10: #{bert_forward.10} parent=0 // pred_check
    _
  $region11: #{bert_forward.10} parent=0 // pred_check_branch
    %13 = sbr.rel (0) target = $region13
  $region12: #{bert_forward.10} parent=0 // pred_region
    _
  $region13: #{bert_forward.10} parent=0 // pred_fallthru
    _
  %p15 = scmp.eq.s32.totalorder 0, 0
  // Predicated region
  $region14: #{bert_forward.10} parent=0 // pred_check
    %p16 = pneg %p15
  $region15: #{bert_forward.10} parent=0 // pred_check_branch
    %18 = sbr.rel (%p16) target = $region17
  $region16: #{bert_forward.10} parent=0 // pred_region
    %vm19 = vcmask 785408
    %20 = vst.msk [vmem:[#allocation2] sm:$0xff] %vm19, 0.0
    %21 = vst.msk [vmem:[#allocation2 + $0x8] sm:$0xff] %vm19, 0.0
  $region17: #{bert_forward.10} parent=0 // pred_fallthru
    _
  %v22 = vld [vmem:[#allocation2] sm:$0xff]
  %v23 = vld [vmem:[#allocation2 + $0x8] sm:$0xff]
  %v24 = vld [vmem:[%s0] sm:$0xf]
  %v25 = vld [vmem:[%s0 + $0x4] sm:$0xf]
  %v26 = vld [vmem:[%s1] sm:$0xf]
  %v27 = vld [vmem:[%s1 + $0x4] sm:$0xf]
  %v28 = vld [vmem:[%s1 + $0x8] sm:$0xf]
  %v29 = vld [vmem:[%s1 + $0xc] sm:$0xf]
  %v32 = vunpack.c.l.b16 %v24
  %v33 = vunpack.c.l.b16 %v25
  %v34 = vpack.c.b16 %v33, %v32
  %v39 = vunpack.c.l.b16 %v26
  %v40 = vunpack.c.l.b16 %v27
  %v41 = vunpack.c.l.b16 %v28
  %v42 = vunpack.c.l.b16 %v29
  %v43 = vpack.c.b16 %v40, %v39
  %v44 = vpack.c.b16 %v42, %v41
  %vm47 = vcmask 261120
  %v49 = vsel %vm47, %v34, 0
  %51 = vmatpush.bf16.msra.mxu0 0
  %52 = vmatpush.bf16.msra.mxu0 0
  %53 = vmatpush.bf16.msra.mxu0 0
  %54 = vmatpush.bf16.msra.mxu0 0
  %55 = vmatpush.bf16.msra.mxu0 0
  %56 = vmatpush.bf16.msra.mxu0 0
  %57 = vmatpush.bf16.msra.mxu0 %v44
  %58 = vmatpush.bf16.msra.mxu0 %v43
  %59 = vmatmul.bf16.gmra.mxu0 %v49
  %v60 = vpop.f32.mrf.mxu0
  %v61 = vadd.f32 0.0, %v60
  %v62 = vpop.f32.mrf.mxu0
  %v63 = vadd.f32 0.0, %v62
  %64 = vdwg.mxu0
  %v65 = vadd.f32 %v22, %v61
  %v66 = vadd.f32 %v23, %v63
  %vm67 = vcmask 785408
  %68 = vst.msk [vmem:[#allocation2] sm:$0xff] %vm67, %v65
  %69 = vst.msk [vmem:[#allocation2 + $0x8] sm:$0xff] %vm67, %v66
  // Predicated region
  $region18: #{bert_forward.10} parent=0 // pred_check
    %p70 = pneg %p15
  $region19: #{bert_forward.10} parent=0 // pred_check_branch
    %72 = sbr.rel (%p70) target = $region21
  $region20: #{bert_forward.10} parent=0 // pred_region
    %v73 = vld [vmem:[#allocation2] sm:$0xff]
    %v74 = vld [vmem:[#allocation2 + $0x8] sm:$0xff]
    %v75 = vld [vmem:[%s2] sm:$0x1]
    %v77 = vperm.slane %v75, 0
    %v79 = vadd.f32 %v73, %v77
    %v80 = vadd.f32 %v74, %v77
    %v81 = vpack.c.bf16 %v79, %v79
    %v82 = vpack.c.bf16 %v80, %v80
    %vm83 = vcmask 781312
    %84 = vst.msk [vmem:[%s3] sm:$0xf] %vm83, %v81
    %85 = vst.msk [vmem:[%s3 + $0x4] sm:$0xf] %vm83, %v82
  $region21: #{bert_forward.10} parent=0 // pred_fallthru
    _
  // Predicated region
  $region22: #{bert_forward.10} parent=0 // pred_check
    _
  $region23: #{bert_forward.10} parent=0 // pred_check_branch
    %87 = sbr.rel (0) target = $region25
  $region24: #{bert_forward.10} parent=0 // pred_region
    _
  $region25: #{bert_forward.10} parent=0 // pred_fallthru
    _
  // Predicated region
  $region26: #{bert_forward.10} parent=0 // pred_check
    _
  $region27: #{bert_forward.10} parent=0 // pred_check_branch
    %89 = sbr.rel (0) target = $region29
  $region28: #{bert_forward.10} parent=0 // pred_region
    _
  $region29: #{bert_forward.10} parent=0 // pred_fallthru
    _

// kernel: bert_forward.11
$region0: #{bert_forward.11}
  #allocation0 [shape = 'u32[]', space=smem, size = 0x4, offset = 0x4, fixed_abs, tag = 'smem constant byte address 0x4 - core index']
  #allocation1 [shape = 'u32[72,128]{1,0:T(1,128)}', space=vmem, size = 0x9000, scoped, tag = 'internal scratch']
  %s0 = inlined_call_operand.vmem [shape: f32[2,1,8], index: 0, kind: input, shape index: {}]
  %s1 = inlined_call_operand.vmem [shape: bf16[2,4,8,8], index: 1, kind: input, shape index: {}]
  %s2 = inlined_call_operand.vmem [shape: bf16[2,4,8,8], index: 2, kind: input, shape index: {}]
  %s3 = inlined_call_operand.vmem [shape: bf16[2,4,8,8], index: 3, kind: input, shape index: {}]
  %s4 = inlined_call_operand.vmem [shape: bf16[2,4,8,8], index: 4, kind: output, shape index: {}]
  %s5 = sld [smem:[#allocation0]]
  $region49: #{bert_forward.11} parent=0
    _
  %s7 = ssub.s32 1, %s5
  %s8 = scalar_select 0, %s7, %s5
  loop: start=0, step=1, limit=10
  $region2: #{bert_forward.11} parent=0 // loop_pre_header
    _
  $region3: #{bert_forward.11} parent=0 // loop_header
    %s10 = sphi 0, %s14
    %p11 = scmp.ge.s32.totalorder %s10, 10
    %s17 = sphi 0, %s29
    %s18 = sphi 0, %s25
    %s19 = sphi 0, %s17
    %s20 = sphi 0, %s18
    %s21 = sphi 0, %s19
    %s22 = sphi 0, %s20
    %s32 = sphi 0, %s34
    %s35 = sphi 0, %s32
    %s36 = sphi 0, %s35
    %s52 = sphi 0, %s36
    %s60 = sphi 0, %s62
    %s63 = sphi 0, %s60
    %s64 = sphi 0, %s63
    %s80 = sphi 0, %s64
    %s88 = sphi 0, %s90
    %s91 = sphi 0, %s88
    %s92 = sphi 0, %s91
    %s108 = sphi 0, %s92
    %s116 = sphi 0, %s118
    %s119 = sphi 0, %s116
    %s120 = sphi 0, %s119
    %s136 = sphi 0, %s120
    %s144 = sphi 0, %s146
    %s147 = sphi 0, %s144
    %s148 = sphi 0, %s147
    %s164 = sphi 0, %s148
  $region4: #{bert_forward.11} parent=0 // loop_header_branch
    %13 = sbr.rel (%p11) target = $region8
  $region5: #{bert_forward.11} parent=0 // loop_body
    %s15 = ssub.s32 %s10, 1
    %s16 = ssub.s32 %s10, 2
    %s23 = sadd.s32 1, %s18
    %p24 = scmp.ge.s32.totalorder %s23, 4
    %s25 = scalar_select %p24, 0, %s23
    %s26 = sadd.s32 1, %s17
    %s27 = scalar_select %p24, %s26, %s17
    %p28 = scmp.ge.s32.totalorder %s27, 2
    %s29 = scalar_select %p28, 0, %s27
    %s30 = ssub.s32 %s17, %s29
    %p31 = scmp.eq.s32.totalorder %s30, 0
    %s33 = sadd.s32 %s32, 1
    %s34 = scalar_select %p31, %s32, %s33
    %p37 = pneg %p31
    %p38 = scmp.eq.s32.totalorder %s10, 7
    %p39 = por %p37, %p38
    %p40 = scmp.ne.s32.totalorder %s32, %s35
    %p41 = scmp.eq.s32.totalorder %s10, 0
    %p42 = por %p40, %p41
    %p43 = scmp.ne.s32.totalorder %s32, %s35
    %p44 = scmp.eq.s32.totalorder %s15, 7
    %p45 = por %p43, %p44
    %p46 = scmp.ne.s32.totalorder %s35, %s36
    %p47 = scmp.eq.s32.totalorder %s15, 0
    %p48 = por %p46, %p47
    %p49 = scmp.ne.s32.totalorder %s35, %s36
    %p50 = scmp.eq.s32.totalorder %s16, 7
    %p51 = por %p49, %p50
    %p53 = scmp.ne.s32.totalorder %s36, %s52
    %p54 = scmp.eq.s32.totalorder %s16, 0
    %p55 = por %p53, %p54
    %s56 = ssub.s32 %s17, %s29
    %s57 = ssub.s32 %s18, %s25
    %s58 = sor.u32 %s56, %s57
    %p59 = scmp.eq.s32.totalorder %s58, 0
    %s61 = sadd.s32 %s60, 1
    %s62 = scalar_select %p59, %s60, %s61
    %p65 = pneg %p59
    %p66 = scmp.eq.s32.totalorder %s10, 7
    %p67 = por %p65, %p66
    %p68 = scmp.ne.s32.totalorder %s60, %s63
    %p69 = scmp.eq.s32.totalorder %s10, 0
    %p70 = por %p68, %p69
    %p71 = scmp.ne.s32.totalorder %s60, %s63
    %p72 = scmp.eq.s32.totalorder %s15, 7
    %p73 = por %p71, %p72
    %p74 = scmp.ne.s32.totalorder %s63, %s64
    %p75 = scmp.eq.s32.totalorder %s15, 0
    %p76 = por %p74, %p75
    %p77 = scmp.ne.s32.totalorder %s63, %s64
    %p78 = scmp.eq.s32.totalorder %s16, 7
    %p79 = por %p77, %p78
    %p81 = scmp.ne.s32.totalorder %s64, %s80
    %p82 = scmp.eq.s32.totalorder %s16, 0
    %p83 = por %p81, %p82
    %s84 = ssub.s32 %s17, %s29
    %s85 = ssub.s32 %s18, %s25
    %s86 = sor.u32 %s84, %s85
    %p87 = scmp.eq.s32.totalorder %s86, 0
    %s89 = sadd.s32 %s88, 1
    %s90 = scalar_select %p87, %s88, %s89
    %p93 = pneg %p87
    %p94 = scmp.eq.s32.totalorder %s10, 7
    %p95 = por %p93, %p94
    %p96 = scmp.ne.s32.totalorder %s88, %s91
    %p97 = scmp.eq.s32.totalorder %s10, 0
    %p98 = por %p96, %p97
    %p99 = scmp.ne.s32.totalorder %s88, %s91
    %p100 = scmp.eq.s32.totalorder %s15, 7
    %p101 = por %p99, %p100
    %p102 = scmp.ne.s32.totalorder %s91, %s92
    %p103 = scmp.eq.s32.totalorder %s15, 0
    %p104 = por %p102, %p103
    %p105 = scmp.ne.s32.totalorder %s91, %s92
    %p106 = scmp.eq.s32.totalorder %s16, 7
    %p107 = por %p105, %p106
    %p109 = scmp.ne.s32.totalorder %s92, %s108
    %p110 = scmp.eq.s32.totalorder %s16, 0
    %p111 = por %p109, %p110
    %s112 = ssub.s32 %s17, %s29
    %s113 = ssub.s32 %s18, %s25
    %s114 = sor.u32 %s112, %s113
    %p115 = scmp.eq.s32.totalorder %s114, 0
    %s117 = sadd.s32 %s116, 1
    %s118 = scalar_select %p115, %s116, %s117
    %p121 = pneg %p115
    %p122 = scmp.eq.s32.totalorder %s10, 7
    %p123 = por %p121, %p122
    %p124 = scmp.ne.s32.totalorder %s116, %s119
    %p125 = scmp.eq.s32.totalorder %s10, 0
    %p126 = por %p124, %p125
    %p127 = scmp.ne.s32.totalorder %s116, %s119
    %p128 = scmp.eq.s32.totalorder %s15, 7
    %p129 = por %p127, %p128
    %p130 = scmp.ne.s32.totalorder %s119, %s120
    %p131 = scmp.eq.s32.totalorder %s15, 0
    %p132 = por %p130, %p131
    %p133 = scmp.ne.s32.totalorder %s119, %s120
    %p134 = scmp.eq.s32.totalorder %s16, 7
    %p135 = por %p133, %p134
    %p137 = scmp.ne.s32.totalorder %s120, %s136
    %p138 = scmp.eq.s32.totalorder %s16, 0
    %p139 = por %p137, %p138
    %s140 = ssub.s32 %s17, %s29
    %s141 = ssub.s32 %s18, %s25
    %s142 = sor.u32 %s140, %s141
    %p143 = scmp.eq.s32.totalorder %s142, 0
    %s145 = sadd.s32 %s144, 1
    %s146 = scalar_select %p143, %s144, %s145
    %p149 = pneg %p143
    %p150 = scmp.eq.s32.totalorder %s10, 7
    %p151 = por %p149, %p150
    %p152 = scmp.ne.s32.totalorder %s144, %s147
    %p153 = scmp.eq.s32.totalorder %s10, 0
    %p154 = por %p152, %p153
    %p155 = scmp.ne.s32.totalorder %s144, %s147
    %p156 = scmp.eq.s32.totalorder %s15, 7
    %p157 = por %p155, %p156
    %p158 = scmp.ne.s32.totalorder %s147, %s148
    %p159 = scmp.eq.s32.totalorder %s15, 0
    %p160 = por %p158, %p159
    %p161 = scmp.ne.s32.totalorder %s147, %s148
    %p162 = scmp.eq.s32.totalorder %s16, 7
    %p163 = por %p161, %p162
    %p165 = scmp.ne.s32.totalorder %s148, %s164
    %p166 = scmp.eq.s32.totalorder %s16, 0
    %p167 = por %p165, %p166
    %p168 = scmp.le.s32.totalorder 1, %s10
    %p169 = scmp.lt.s32.totalorder %s10, 9
    %p170 = pnand %p168, %p169
    %p171 = pneg %p170
    // Predicated region
    $region9: #{bert_forward.11} parent=5 // pred_check
      _
    $region10: #{bert_forward.11} parent=5 // pred_check_branch
      %173 = sbr.rel (%p170) target = $region12
    $region11: #{bert_forward.11} parent=5 // pred_region
      %s174 = ssub.s32 %s10, 1
    $region12: #{bert_forward.11} parent=5 // pred_fallthru
      _
    %p175 = scmp.lt.s32.totalorder %s10, 8
    // Predicated region
    $region13: #{bert_forward.11} parent=5 // pred_check
      %p176 = pneg %p175
    $region14: #{bert_forward.11} parent=5 // pred_check_branch
      %178 = sbr.rel (%p176) target = $region16
    $region15: #{bert_forward.11} parent=5 // pred_region
      // Predicated region
      $region17: #{bert_forward.11} parent=15 // pred_check
        %p179 = pneg %p42
      $region18: #{bert_forward.11} parent=15 // pred_check_branch
        %181 = sbr.rel (%p179) target = $region20
      $region19: #{bert_forward.11} parent=15 // pred_region
        %p182 = scmp.lt.s32.totalorder %s17, 1
        %s183 = scalar_select %p182, %s17, 1
        %s184 = scalar_lea.vmem %s0, %s183
      $region20: #{bert_forward.11} parent=15 // pred_fallthru
        _
      // Predicated region
      $region21: #{bert_forward.11} parent=15 // pred_check
        %p185 = pneg %p70
      $region22: #{bert_forward.11} parent=15 // pred_check_branch
        %187 = sbr.rel (%p185) target = $region24
      $region23: #{bert_forward.11} parent=15 // pred_region
        %p188 = scmp.lt.s32.totalorder %s17, 1
        %s189 = scalar_select %p188, %s17, 1
        %p190 = scmp.lt.s32.totalorder %s18, 3
        %s191 = scalar_select %p190, %s18, 3
        %s192 = smul.addr %s189, 4
        %s193 = sadd.s32 %s191, %s192
        %s194 = smul.addr %s193, 4
        %s195 = scalar_lea.vmem %s1, %s194
      $region24: #{bert_forward.11} parent=15 // pred_fallthru
        _
      // Predicated region
      $region25: #{bert_forward.11} parent=15 // pred_check
        %p196 = pneg %p98
      $region26: #{bert_forward.11} parent=15 // pred_check_branch
        %198 = sbr.rel (%p196) target = $region28
      $region27: #{bert_forward.11} parent=15 // pred_region
        %p199 = scmp.lt.s32.totalorder %s17, 1
        %s200 = scalar_select %p199, %s17, 1
        %p201 = scmp.lt.s32.totalorder %s18, 3
        %s202 = scalar_select %p201, %s18, 3
        %s203 = smul.addr %s200, 4
        %s204 = sadd.s32 %s202, %s203
        %s205 = smul.addr %s204, 4
        %s206 = scalar_lea.vmem %s2, %s205
      $region28: #{bert_forward.11} parent=15 // pred_fallthru
        _
      // Predicated region
      $region29: #{bert_forward.11} parent=15 // pred_check
        %p207 = pneg %p126
      $region30: #{bert_forward.11} parent=15 // pred_check_branch
        %209 = sbr.rel (%p207) target = $region32
      $region31: #{bert_forward.11} parent=15 // pred_region
        %p210 = scmp.lt.s32.totalorder %s17, 1
        %s211 = scalar_select %p210, %s17, 1
        %p212 = scmp.lt.s32.totalorder %s18, 3
        %s213 = scalar_select %p212, %s18, 3
        %s214 = smul.addr %s211, 4
        %s215 = sadd.s32 %s213, %s214
        %s216 = smul.addr %s215, 4
        %s217 = scalar_lea.vmem %s3, %s216
      $region32: #{bert_forward.11} parent=15 // pred_fallthru
        _
    $region16: #{bert_forward.11} parent=5 // pred_fallthru
      _
    %p218 = scmp.le.s32.totalorder 1, %s10
    %p219 = scmp.lt.s32.totalorder %s10, 9
    %p220 = pnand %p218, %p219
    %p221 = pneg %p220
    // Predicated region
    $region33: #{bert_forward.11} parent=5 // pred_check
      _
    $region34: #{bert_forward.11} parent=5 // pred_check_branch
      %223 = sbr.rel (%p220) target = $region36
    $region35: #{bert_forward.11} parent=5 // pred_region
      %s224 = ssub.s32 %s10, 1
      %p225 = scmp.lt.s32.totalorder %s19, 1
      %s226 = scalar_select %p225, %s19, 1
      %s227 = scalar_lea.vmem %s0, %s226
      %p228 = pneg %p48
      %p229 = pneg %p45
      %p230 = scmp.lt.s32.totalorder %s19, 1
      %s231 = scalar_select %p230, %s19, 1
      %p232 = scmp.lt.s32.totalorder %s20, 3
      %s233 = scalar_select %p232, %s20, 3
      %s234 = smul.addr %s231, 4
      %s235 = sadd.s32 %s233, %s234
      %s236 = smul.addr %s235, 4
      %s237 = scalar_lea.vmem %s1, %s236
      %p238 = pneg %p76
      %p239 = pneg %p73
      %p240 = scmp.lt.s32.totalorder %s19, 1
      %s241 = scalar_select %p240, %s19, 1
      %p242 = scmp.lt.s32.totalorder %s20, 3
      %s243 = scalar_select %p242, %s20, 3
      %s244 = smul.addr %s241, 4
      %s245 = sadd.s32 %s243, %s244
      %s246 = smul.addr %s245, 4
      %s247 = scalar_lea.vmem %s2, %s246
      %p248 = pneg %p104
      %p249 = pneg %p101
      %p250 = scmp.lt.s32.totalorder %s19, 1
      %s251 = scalar_select %p250, %s19, 1
      %p252 = scmp.lt.s32.totalorder %s20, 3
      %s253 = scalar_select %p252, %s20, 3
      %s254 = smul.addr %s251, 4
      %s255 = sadd.s32 %s253, %s254
      %s256 = smul.addr %s255, 4
      %s257 = scalar_lea.vmem %s3, %s256
      %p258 = pneg %p132
      %p259 = pneg %p129
      %p260 = pneg %p160
      %p261 = pneg %p157
      %p262 = scmp.lt.s32.totalorder %s19, 1
      %s263 = scalar_select %p262, %s19, 1
      %p264 = scmp.lt.s32.totalorder %s20, 3
      %s265 = scalar_select %p264, %s20, 3
      %s266 = smul.addr %s263, 4
      %s267 = sadd.s32 %s265, %s266
      %s268 = smul.addr %s267, 4
      %s269 = scalar_lea.vmem %s4, %s268
      %p270 = scmp.lt.s32.totalorder %s19, 1
      %s271 = scalar_select %p270, %s19, 1
      %s272 = scalar_lea.vmem %s0, %s271
      %p273 = scmp.lt.s32.totalorder %s19, 1
      %s274 = scalar_select %p273, %s19, 1
      %p275 = scmp.lt.s32.totalorder %s20, 3
      %s276 = scalar_select %p275, %s20, 3
      %s277 = smul.addr %s274, 4
      %s278 = sadd.s32 %s276, %s277
      %s279 = smul.addr %s278, 4
      %s280 = scalar_lea.vmem %s1, %s279
      %p281 = scmp.lt.s32.totalorder %s19, 1
      %s282 = scalar_select %p281, %s19, 1
      %p283 = scmp.lt.s32.totalorder %s20, 3
      %s284 = scalar_select %p283, %s20, 3
      %s285 = smul.addr %s282, 4
      %s286 = sadd.s32 %s284, %s285
      %s287 = smul.addr %s286, 4
      %s288 = scalar_lea.vmem %s2, %s287
      %p289 = scmp.lt.s32.totalorder %s19, 1
      %s290 = scalar_select %p289, %s19, 1
      %p291 = scmp.lt.s32.totalorder %s20, 3
      %s292 = scalar_select %p291, %s20, 3
      %s293 = smul.addr %s290, 4
      %s294 = sadd.s32 %s292, %s293
      %s295 = smul.addr %s294, 4
      %s296 = scalar_lea.vmem %s3, %s295
      %p297 = scmp.lt.s32.totalorder %s19, 1
      %s298 = scalar_select %p297, %s19, 1
      %p299 = scmp.lt.s32.totalorder %s20, 3
      %s300 = scalar_select %p299, %s20, 3
      %s301 = smul.addr %s298, 4
      %s302 = sadd.s32 %s300, %s301
      %s303 = smul.addr %s302, 4
      %s304 = scalar_lea.vmem %s4, %s303
      %v306 = vld [vmem:[%s272] sm:$0x1]
      %v307 = vld [vmem:[%s280] sm:$0xf]
      %v308 = vld [vmem:[%s288] sm:$0xf]
      %v309 = vld [vmem:[%s296] sm:$0xf]
      %vm310 = vcmask 64512
      %v312 = vsel %vm310, %v307, 0
      %vm314 = vcmask 1043456
      %v316 = vsel %vm314, %v308, 0
      %318 = vmatpush.bf16.msra.mxu0 0
      %319 = vmatpush.bf16.msra.mxu0 0
      %320 = vmatpush.bf16.msra.mxu0 0
      %321 = vmatpush.bf16.msra.mxu0 0
      %322 = vmatpush.bf16.msra.mxu0 0
      %323 = vmatpush.bf16.msra.mxu0 0
      %324 = vmatpush.bf16.msra.mxu0 0
      %325 = vmatpush.bf16.msra.mxu0 %v316
      %326 = vmatmul.bf16.gmra.mxu0 %v312
      %v327 = vpop.f32.mrf.mxu0
      %v328 = vadd.f32 0.0, %v327
      %v329 = vpop.f32.mrf.mxu0
      %330 = vdwg.mxu0
      %v331 = vmul.f32 %v328, 0.35355338
      %v333 = vperm.slane %v306, 0
      %v335 = vadd.f32 %v331, %v333
      %v336 = vsel %vm310, %v335, -inf
      %337 = vmax.xlane.f32.xlu0 %v336
      %v338 = vpop.xlane.xlu0 %337
      %v339 = vsub.f32 %v335, %v338
      %v340 = vmul.f32 %v339, 1.442695
      %v341 = vpow.pop %v340
      %v342 = vsel %vm310, %v341, 0.0
      %343 = vadd.xlane.f32.xlu0 %v342
      %v344 = vpop.xlane.xlu0 %343
      %v345 = vrcp.pop %v344
      %v346 = vmul.f32 %v341, %v345
      %v347 = vpack.c.bf16 %v346, %v346
      %v349 = vsel %vm310, %v347, 0
      %v352 = vsel %vm314, %v309, 0
      %354 = vmatpush.bf16.msra.mxu0 0
      %355 = vmatpush.bf16.msra.mxu0 0
      %356 = vmatpush.bf16.msra.mxu0 0
      %357 = vmatpush.bf16.msra.mxu0 0
      %358 = vmatpush.bf16.msra.mxu0 0
      %359 = vmatpush.bf16.msra.mxu0 0
      %360 = vmatpush.bf16.msra.mxu0 0
      %361 = vmatpush.bf16.msra.mxu0 %v352
      %362 = vmatmul.bf16.gmra.mxu0 %v349
      %v363 = vpop.f32.mrf.mxu0
      %v364 = vadd.f32 0.0, %v363
      %v365 = vpop.f32.mrf.mxu0
      %366 = vdwg.mxu0
      %v367 = vpack.c.bf16 %v364, %v364
      %vm368 = vcmask 60416
      %369 = vst.msk [vmem:[%s304] sm:$0xf] %vm368, %v367
      %p370 = scmp.lt.s32.totalorder %s19, 1
      %s371 = scalar_select %p370, %s19, 1
      %p372 = scmp.lt.s32.totalorder %s20, 3
      %s373 = scalar_select %p372, %s20, 3
      %s374 = smul.addr %s371, 4
      %s375 = sadd.s32 %s373, %s374
      %s376 = smul.addr %s375, 4
      %s377 = scalar_lea.vmem %s4, %s376
      // Predicated region
      $region37: #{bert_forward.11} parent=35 // pred_check
        %p378 = pneg %p157
      $region38: #{bert_forward.11} parent=35 // pred_check_branch
        %380 = sbr.rel (%p378) target = $region40
      $region39: #{bert_forward.11} parent=35 // pred_region
        _
      $region40: #{bert_forward.11} parent=35 // pred_fallthru
        _
    $region36: #{bert_forward.11} parent=5 // pred_fallthru
      _
    %p381 = scmp.le.s32.totalorder 2, %s10
    // Predicated region
    $region41: #{bert_forward.11} parent=5 // pred_check
      %p382 = pneg %p381
    $region42: #{bert_forward.11} parent=5 // pred_check_branch
      %384 = sbr.rel (%p382) target = $region44
    $region43: #{bert_forward.11} parent=5 // pred_region
      %s385 = ssub.s32 %s10, 2
      // Predicated region
      $region45: #{bert_forward.11} parent=43 // pred_check
        %p386 = pneg %p163
      $region46: #{bert_forward.11} parent=43 // pred_check_branch
        %388 = sbr.rel (%p386) target = $region48
      $region47: #{bert_forward.11} parent=43 // pred_region
        %p389 = scmp.lt.s32.totalorder %s21, 1
        %s390 = scalar_select %p389, %s21, 1
        %p391 = scmp.lt.s32.totalorder %s22, 3
        %s392 = scalar_select %p391, %s22, 3
        %s393 = smul.addr %s390, 4
        %s394 = sadd.s32 %s392, %s393
        %s395 = smul.addr %s394, 4
        %s396 = scalar_lea.vmem %s4, %s395
      $region48: #{bert_forward.11} parent=43 // pred_fallthru
        _
    $region44: #{bert_forward.11} parent=5 // pred_fallthru
      _
  $region6: #{bert_forward.11} parent=0 // loop_footer
    %s14 = sadd.s32 1, %s10
  $region7: #{bert_forward.11} parent=0 // loop_footer_branch
    %9 = sbr.rel target = $region3
  $region8: #{bert_forward.11} parent=0 // loop_exit
    _

// kernel: bert_forward.12
$region0: #{bert_forward.12}
  #allocation0 [shape = 'u32[]', space=smem, size = 0x4, offset = 0x4, fixed_abs, tag = 'smem constant byte address 0x4 - core index']
  #allocation1 [shape = 'u32[72,128]{1,0:T(1,128)}', space=vmem, size = 0x9000, scoped, tag = 'internal scratch']
  %s0 = inlined_call_operand.vmem [shape: bf16[16,32], index: 0, kind: input, shape index: {}]
  %s1 = inlined_call_operand.vmem [shape: bf16[32,32], index: 1, kind: input, shape index: {}]
  %s2 = inlined_call_operand.vmem [shape: f32[1,32], index: 2, kind: input, shape index: {}]
  %s3 = inlined_call_operand.vmem [shape: bf16[16,32], index: 3, kind: input, shape index: {}]
  %s4 = inlined_call_operand.vmem [shape: f32[1,32], index: 4, kind: input, shape index: {}]
  %s5 = inlined_call_operand.vmem [shape: f32[1,32], index: 5, kind: input, shape index: {}]
  %s6 = inlined_call_operand.vmem [shape: bf16[16,32], index: 6, kind: output, shape index: {}]
  %s7 = sld [smem:[#allocation0]]
  $region34: #{bert_forward.12} parent=0
    _
  %s9 = ssub.s32 1, %s7
  %s10 = scalar_select 0, %s9, %s7
  // Predicated region
  $region2: #{bert_forward.12} parent=0 // pred_check
    _
  $region3: #{bert_forward.12} parent=0 // pred_check_branch
    %12 = sbr.rel (0) target = $region5
  $region4: #{bert_forward.12} parent=0 // pred_region
    _
  $region5: #{bert_forward.12} parent=0 // pred_fallthru
    _
  // Predicated region
  $region6: #{bert_forward.12} parent=0 // pred_check
    _
  $region7: #{bert_forward.12} parent=0 // pred_check_branch
    %14 = sbr.rel (0) target = $region9
  $region8: #{bert_forward.12} parent=0 // pred_region
    _
  $region9: #{bert_forward.12} parent=0 // pred_fallthru
    _
  // Predicated region
  $region10: #{bert_forward.12} parent=0 // pred_check
    _
  $region11: #{bert_forward.12} parent=0 // pred_check_branch
    %16 = sbr.rel (0) target = $region13
  $region12: #{bert_forward.12} parent=0 // pred_region
    _
  $region13: #{bert_forward.12} parent=0 // pred_fallthru
    _
  // Predicated region
  $region14: #{bert_forward.12} parent=0 // pred_check
    _
  $region15: #{bert_forward.12} parent=0 // pred_check_branch
    %18 = sbr.rel (0) target = $region17
  $region16: #{bert_forward.12} parent=0 // pred_region
    _
  $region17: #{bert_forward.12} parent=0 // pred_fallthru
    _
  // Predicated region
  $region18: #{bert_forward.12} parent=0 // pred_check
    _
  $region19: #{bert_forward.12} parent=0 // pred_check_branch
    %20 = sbr.rel (0) target = $region21
  $region20: #{bert_forward.12} parent=0 // pred_region
    _
  $region21: #{bert_forward.12} parent=0 // pred_fallthru
    _
  // Predicated region
  $region22: #{bert_forward.12} parent=0 // pred_check
    _
  $region23: #{bert_forward.12} parent=0 // pred_check_branch
    %22 = sbr.rel (0) target = $region25
  $region24: #{bert_forward.12} parent=0 // pred_region
    _
  $region25: #{bert_forward.12} parent=0 // pred_fallthru
    _
  %v24 = vld [vmem:[%s0] sm:$0xf]
  %v25 = vld [vmem:[%s0 + $0x4] sm:$0xf]
  %v26 = vld [vmem:[%s1] sm:$0xf]
  %v27 = vld [vmem:[%s1 + $0x4] sm:$0xf]
  %v28 = vld [vmem:[%s1 + $0x8] sm:$0xf]
  %v29 = vld [vmem:[%s1 + $0xc] sm:$0xf]
  %v30 = vld [vmem:[%s2] sm:$0x1]
  %v32 = vperm.slane %v30, 0
  %v36 = vunpack.c.l.b16 %v24
  %v37 = vunpack.c.l.b16 %v25
  %v38 = vpack.c.b16 %v37, %v36
  %v43 = vunpack.c.l.b16 %v26
  %v44 = vunpack.c.l.b16 %v27
  %v45 = vunpack.c.l.b16 %v28
  %v46 = vunpack.c.l.b16 %v29
  %v47 = vpack.c.b16 %v44, %v43
  %v48 = vpack.c.b16 %v46, %v45
  %vm51 = vcmask 261120
  %v53 = vsel %vm51, %v38, 0
  %55 = vmatpush.bf16.msra.mxu0 0
  %56 = vmatpush.bf16.msra.mxu0 0
  %57 = vmatpush.bf16.msra.mxu0 0
  %58 = vmatpush.bf16.msra.mxu0 0
  %59 = vmatpush.bf16.msra.mxu0 0
  %60 = vmatpush.bf16.msra.mxu0 0
  %61 = vmatpush.bf16.msra.mxu0 %v48
  %62 = vmatpush.bf16.msra.mxu0 %v47
  %63 = vmatmul.bf16.gmra.mxu0 %v53
  %v64 = vpop.f32.mrf.mxu0
  %v65 = vadd.f32 %v32, %v64
  %v66 = vpop.f32.mrf.mxu0
  %v67 = vadd.f32 %v32, %v66
  %68 = vdwg.mxu0
  %v69 = vld [vmem:[%s3] sm:$0xf]
  %v70 = vld [vmem:[%s3 + $0x4] sm:$0xf]
  %v71 = vunpack.c.l.bf16 %v69
  %v72 = vunpack.c.l.bf16 %v70
  %v73 = vadd.f32 %v65, %v71
  %v74 = vadd.f32 %v67, %v72
  %v75 = vsel %vm51, %v73, 0.0
  %76 = vadd.xlane.f32.xlu0 %v75
  %v77 = vpop.xlane.xlu0 %76
  %v78 = vsel %vm51, %v74, 0.0
  %79 = vadd.xlane.f32.xlu0 %v78
  %v80 = vpop.xlane.xlu0 %79
  %v81 = vrcp.pop 32.0
  %v82 = vmul.f32 32.0, %v81
  %v83 = vsub.f32 1.0, %v82
  %v84 = vmul.f32 %v81, %v83
  %v85 = vadd.f32 %v81, %v84
  %vm86 = vweird.f32 %v81
  %v87 = vsel %vm86, %v81, %v85
  %v88 = vmul.f32 %v77, %v87
  %v89 = vmul.f32 %v80, %v87
  %v90 = vsub.f32 %v73, %v88
  %v91 = vsub.f32 %v74, %v89
  %v92 = vmul.f32 %v90, %v90
  %v93 = vmul.f32 %v91, %v91
  %v94 = vsel %vm51, %v92, 0.0
  %95 = vadd.xlane.f32.xlu0 %v94
  %v96 = vpop.xlane.xlu0 %95
  %v97 = vsel %vm51, %v93, 0.0
  %98 = vadd.xlane.f32.xlu0 %v97
  %v99 = vpop.xlane.xlu0 %98
  %v100 = vmul.f32 %v96, %v87
  %v101 = vmul.f32 %v99, %v87
  %v102 = vadd.f32 %v100, 1e-05
  %v103 = vadd.f32 %v101, 1e-05
  %v104 = vrsqrt.pop %v102
  %v105 = vmul.f32 %v104, %v102
  %v106 = vmul.f32 %v105, %v104
  %v107 = vmul.f32 0.5, %v106
  %v108 = vsub.f32 1.5, %v107
  %v109 = vmul.f32 %v104, %v108
  %vm110 = vweird.f32 %v102
  %vm111 = vweird.f32 %v104
  %vm112 = vmor %vm110, %vm111
  %v113 = vsel %vm112, %v104, %v109
  %v114 = vrsqrt.pop %v103
  %v115 = vmul.f32 %v114, %v103
  %v116 = vmul.f32 %v115, %v114
  %v117 = vmul.f32 0.5, %v116
  %v118 = vsub.f32 1.5, %v117
  %v119 = vmul.f32 %v114, %v118
  %vm120 = vweird.f32 %v103
  %vm121 = vweird.f32 %v114
  %vm122 = vmor %vm120, %vm121
  %v123 = vsel %vm122, %v114, %v119
  %v124 = vmul.f32 %v90, %v113
  %v125 = vmul.f32 %v91, %v123
  %v126 = vld [vmem:[%s4] sm:$0x1]
  %v128 = vperm.slane %v126, 0
  %v130 = vmul.f32 %v124, %v128
  %v131 = vmul.f32 %v125, %v128
  %v132 = vld [vmem:[%s5] sm:$0x1]
  %v134 = vperm.slane %v132, 0
  %v136 = vadd.f32 %v130, %v134
  %v137 = vadd.f32 %v131, %v134
  %v138 = vpack.c.bf16 %v136, %v136
  %v139 = vpack.c.bf16 %v137, %v137
  %vm140 = vcmask 257024
  %141 = vst.msk [vmem:[%s6] sm:$0xf] %vm140, %v138
  %142 = vst.msk [vmem:[%s6 + $0x4] sm:$0xf] %vm140, %v139
  // Predicated region
  $region26: #{bert_forward.12} parent=0 // pred_check
    _
  $region27: #{bert_forward.12} parent=0 // pred_check_branch
    %144 = sbr.rel (0) target = $region29
  $region28: #{bert_forward.12} parent=0 // pred_region
    _
  $region29: #{bert_forward.12} parent=0 // pred_fallthru
    _
  // Predicated region
  $region30: #{bert_forward.12} parent=0 // pred_check
    _
  $region31: #{bert_forward.12} parent=0 // pred_check_branch
    %146 = sbr.rel (0) target = $region33
  $region32: #{bert_forward.12} parent=0 // pred_region
    _
  $region33: #{bert_forward.12} parent=0 // pred_fallthru
    _

// kernel: bert_forward.13
$region0: #{bert_forward.13}
  #allocation0 [shape = 'u32[]', space=smem, size = 0x4, offset = 0x4, fixed_abs, tag = 'smem constant byte address 0x4 - core index']
  #allocation1 [shape = 'u32[72,128]{1,0:T(1,128)}', space=vmem, size = 0x9000, scoped, tag = 'internal scratch']
  #allocation2 [shape = 'f32[16,32]{1,0:T(8,128)}', space=vmem, size = 0x2000, scoped, tag = 'scratch operand']
  %s0 = inlined_call_operand.vmem [shape: bf16[16,32], index: 0, kind: input, shape index: {}, may-alias: {0,5}]
  %s1 = inlined_call_operand.vmem [shape: bf16[32,64], index: 1, kind: input, shape index: {}]
  %s2 = inlined_call_operand.vmem [shape: f32[1,64], index: 2, kind: input, shape index: {}]
  %s3 = inlined_call_operand.vmem [shape: bf16[64,32], index: 3, kind: input, shape index: {}]
  %s4 = inlined_call_operand.vmem [shape: f32[1,32], index: 4, kind: input, shape index: {}]
  %s5 = inlined_call_operand.vmem [shape: bf16[16,32], index: 5, kind: input, shape index: {}, may-alias: {0,5}]
  %s6 = inlined_call_operand.vmem [shape: f32[1,32], index: 6, kind: input, shape index: {}]
  %s7 = inlined_call_operand.vmem [shape: f32[1,32], index: 7, kind: input, shape index: {}]
  %s8 = inlined_call_operand.vmem [shape: bf16[16,32], index: 8, kind: output, shape index: {}]
  %s9 = sld [smem:[#allocation0]]
  $region50: #{bert_forward.13} parent=0
    _
  %s11 = ssub.s32 1, %s9
  %s12 = scalar_select 0, %s11, %s9
  // Predicated region
  $region2: #{bert_forward.13} parent=0 // pred_check
    _
  $region3: #{bert_forward.13} parent=0 // pred_check_branch
    %14 = sbr.rel (0) target = $region5
  $region4: #{bert_forward.13} parent=0 // pred_region
    _
  $region5: #{bert_forward.13} parent=0 // pred_fallthru
    _
  // Predicated region
  $region6: #{bert_forward.13} parent=0 // pred_check
    _
  $region7: #{bert_forward.13} parent=0 // pred_check_branch
    %16 = sbr.rel (0) target = $region9
  $region8: #{bert_forward.13} parent=0 // pred_region
    _
  $region9: #{bert_forward.13} parent=0 // pred_fallthru
    _
  // Predicated region
  $region10: #{bert_forward.13} parent=0 // pred_check
    _
  $region11: #{bert_forward.13} parent=0 // pred_check_branch
    %18 = sbr.rel (0) target = $region13
  $region12: #{bert_forward.13} parent=0 // pred_region
    _
  $region13: #{bert_forward.13} parent=0 // pred_fallthru
    _
  // Predicated region
  $region14: #{bert_forward.13} parent=0 // pred_check
    _
  $region15: #{bert_forward.13} parent=0 // pred_check_branch
    %20 = sbr.rel (0) target = $region17
  $region16: #{bert_forward.13} parent=0 // pred_region
    _
  $region17: #{bert_forward.13} parent=0 // pred_fallthru
    _
  // Predicated region
  $region18: #{bert_forward.13} parent=0 // pred_check
    _
  $region19: #{bert_forward.13} parent=0 // pred_check_branch
    %22 = sbr.rel (0) target = $region21
  $region20: #{bert_forward.13} parent=0 // pred_region
    _
  $region21: #{bert_forward.13} parent=0 // pred_fallthru
    _
  // Predicated region
  $region22: #{bert_forward.13} parent=0 // pred_check
    _
  $region23: #{bert_forward.13} parent=0 // pred_check_branch
    %24 = sbr.rel (0) target = $region25
  $region24: #{bert_forward.13} parent=0 // pred_region
    _
  $region25: #{bert_forward.13} parent=0 // pred_fallthru
    _
  // Predicated region
  $region26: #{bert_forward.13} parent=0 // pred_check
    _
  $region27: #{bert_forward.13} parent=0 // pred_check_branch
    %26 = sbr.rel (0) target = $region29
  $region28: #{bert_forward.13} parent=0 // pred_region
    _
  $region29: #{bert_forward.13} parent=0 // pred_fallthru
    _
  // Predicated region
  $region30: #{bert_forward.13} parent=0 // pred_check
    _
  $region31: #{bert_forward.13} parent=0 // pred_check_branch
    %28 = sbr.rel (0) target = $region33
  $region32: #{bert_forward.13} parent=0 // pred_region
    _
  $region33: #{bert_forward.13} parent=0 // pred_fallthru
    _
  %p30 = scmp.eq.s32.totalorder 0, 0
  // Predicated region
  $region34: #{bert_forward.13} parent=0 // pred_check
    %p31 = pneg %p30
  $region35: #{bert_forward.13} parent=0 // pred_check_branch
    %33 = sbr.rel (%p31) target = $region37
  $region36: #{bert_forward.13} parent=0 // pred_region
    %vm34 = vcmask 261120
    %35 = vst.msk [vmem:[#allocation2] sm:$0xff] %vm34, 0.0
    %36 = vst.msk [vmem:[#allocation2 + $0x8] sm:$0xff] %vm34, 0.0
  $region37: #{bert_forward.13} parent=0 // pred_fallthru
    _
  %v37 = vld [vmem:[%s0] sm:$0xf]
  %v38 = vld [vmem:[%s0 + $0x4] sm:$0xf]
  %v39 = vld [vmem:[%s1] sm:$0xf]
  %v40 = vld [vmem:[%s1 + $0x4] sm:$0xf]
  %v41 = vld [vmem:[%s1 + $0x8] sm:$0xf]
  %v42 = vld [vmem:[%s1 + $0xc] sm:$0xf]
  %v43 = vld [vmem:[%s2] sm:$0x1]
  %v45 = vperm.slane %v43, 0
  %v49 = vunpack.c.l.b16 %v37
  %v50 = vunpack.c.l.b16 %v38
  %v51 = vpack.c.b16 %v50, %v49
  %v56 = vunpack.c.l.b16 %v39
  %v57 = vunpack.c.l.b16 %v40
  %v58 = vunpack.c.l.b16 %v41
  %v59 = vunpack.c.l.b16 %v42
  %v60 = vpack.c.b16 %v57, %v56
  %v61 = vpack.c.b16 %v59, %v58
  %vm64 = vcmask 261120
  %v66 = vsel %vm64, %v51, 0
  %68 = vmatpush.bf16.msra.mxu0 0
  %69 = vmatpush.bf16.msra.mxu0 0
  %70 = vmatpush.bf16.msra.mxu0 0
  %71 = vmatpush.bf16.msra.mxu0 0
  %72 = vmatpush.bf16.msra.mxu0 0
  %73 = vmatpush.bf16.msra.mxu0 0
  %74 = vmatpush.bf16.msra.mxu0 %v61
  %75 = vmatpush.bf16.msra.mxu0 %v60
  %76 = vmatmul.bf16.gmra.mxu0 %v66
  %v77 = vpop.f32.mrf.mxu0
  %v78 = vadd.f32 %v45, %v77
  %v79 = vpop.f32.mrf.mxu0
  %v80 = vadd.f32 %v45, %v79
  %81 = vdwg.mxu0
  %v82 = vpack.c.bf16 %v78, %v78
  %v83 = vpack.c.bf16 %v80, %v80
  %v84 = vunpack.c.l.bf16 %v82
  %v85 = vunpack.c.l.bf16 %v83
  %v86 = vmul.f32 %v84, 0.5
  %v87 = vmul.f32 %v85, 0.5
  %v88 = vpack.c.bf16 %v86, %v86
  %v89 = vpack.c.bf16 %v87, %v87
  %v90 = vmul.f32 %v84, 0.044677734
  %v91 = vmul.f32 %v85, 0.044677734
  %v92 = vpack.c.bf16 %v90, %v90
  %v93 = vpack.c.bf16 %v91, %v91
  %v94 = vunpack.c.l.bf16 %v92
  %v95 = vunpack.c.l.bf16 %v93
  %v96 = vmul.f32 %v94, %v84
  %v97 = vmul.f32 %v95, %v85
  %v98 = vpack.c.bf16 %v96, %v96
  %v99 = vpack.c.bf16 %v97, %v97
  %v100 = vunpack.c.l.bf16 %v98
  %v101 = vunpack.c.l.bf16 %v99
  %v102 = vmul.f32 %v100, %v84
  %v103 = vmul.f32 %v101, %v85
  %v104 = vpack.c.bf16 %v102, %v102
  %v105 = vpack.c.bf16 %v103, %v103
  %v106 = vunpack.c.l.bf16 %v104
  %v107 = vunpack.c.l.bf16 %v105
  %v108 = vadd.f32 %v84, %v106
  %v109 = vadd.f32 %v85, %v107
  %v110 = vpack.c.bf16 %v108, %v108
  %v111 = vpack.c.bf16 %v109, %v109
  %v112 = vunpack.c.l.bf16 %v110
  %v113 = vunpack.c.l.bf16 %v111
  %v114 = vmul.f32 %v112, 0.796875
  %v115 = vmul.f32 %v113, 0.796875
  %v116 = vpack.c.bf16 %v114, %v114
  %v117 = vpack.c.bf16 %v115, %v115
  %v118 = vunpack.c.l.bf16 %v116
  %v119 = vunpack.c.l.bf16 %v117
  %v120 = vtanh.pop %v118
  %v121 = vtanh.pop %v119
  %v122 = vpack.c.bf16 %v120, %v120
  %v123 = vpack.c.bf16 %v121, %v121
  %v124 = vunpack.c.l.bf16 %v122
  %v125 = vunpack.c.l.bf16 %v123
  %v126 = vadd.f32 %v124, 1.0
  %v127 = vadd.f32 %v125, 1.0
  %v128 = vpack.c.bf16 %v126, %v126
  %v129 = vpack.c.bf16 %v127, %v127
  %v130 = vunpack.c.l.bf16 %v88
  %v131 = vunpack.c.l.bf16 %v89
  %v132 = vunpack.c.l.bf16 %v128
  %v133 = vunpack.c.l.bf16 %v129
  %v134 = vmul.f32 %v130, %v132
  %v135 = vmul.f32 %v131, %v133
  %v136 = vpack.c.bf16 %v135, %v134
  %v137 = vld [vmem:[#allocation2] sm:$0xff]
  %v138 = vld [vmem:[#allocation2 + $0x8] sm:$0xff]
  %v139 = vld [vmem:[%s3] sm:$0xf]
  %v140 = vld [vmem:[%s3 + $0x4] sm:$0xf]
  %v141 = vld [vmem:[%s3 + $0x8] sm:$0xf]
  %v142 = vld [vmem:[%s3 + $0xc] sm:$0xf]
  %v143 = vld [vmem:[%s3 + $0x10] sm:$0xf]
  %v144 = vld [vmem:[%s3 + $0x14] sm:$0xf]
  %v145 = vld [vmem:[%s3 + $0x18] sm:$0xf]
  %v146 = vld [vmem:[%s3 + $0x1c] sm:$0xf]
  %v155 = vunpack.c.l.b16 %v139
  %v156 = vunpack.c.l.b16 %v140
  %v157 = vunpack.c.l.b16 %v141
  %v158 = vunpack.c.l.b16 %v142
  %v159 = vunpack.c.l.b16 %v143
  %v160 = vunpack.c.l.b16 %v144
  %v161 = vunpack.c.l.b16 %v145
  %v162 = vunpack.c.l.b16 %v146
  %v163 = vpack.c.b16 %v156, %v155
  %v164 = vpack.c.b16 %v158, %v157
  %v165 = vpack.c.b16 %v160, %v159
  %v166 = vpack.c.b16 %v162, %v161
  %vm171 = vcmask 523264
  %v173 = vsel %vm171, %v136, 0
  %175 = vmatpush.bf16.msra.mxu0 0
  %176 = vmatpush.bf16.msra.mxu0 0
  %177 = vmatpush.bf16.msra.mxu0 0
  %178 = vmatpush.bf16.msra.mxu0 0
  %179 = vmatpush.bf16.msra.mxu0 %v166
  %180 = vmatpush.bf16.msra.mxu0 %v165
  %181 = vmatpush.bf16.msra.mxu0 %v164
  %182 = vmatpush.bf16.msra.mxu0 %v163
  %183 = vmatmul.bf16.gmra.mxu0 %v173
  %v184 = vpop.f32.mrf.mxu0
  %v185 = vadd.f32 0.0, %v184
  %v186 = vpop.f32.mrf.mxu0
  %v187 = vadd.f32 0.0, %v186
  %188 = vdwg.mxu0
  %v189 = vadd.f32 %v137, %v185
  %v190 = vadd.f32 %v138, %v187
  %191 = vst.msk [vmem:[#allocation2] sm:$0xff] %vm64, %v189
  %192 = vst.msk [vmem:[#allocation2 + $0x8] sm:$0xff] %vm64, %v190
  // Predicated region
  $region38: #{bert_forward.13} parent=0 // pred_check
    %p193 = pneg %p30
  $region39: #{bert_forward.13} parent=0 // pred_check_branch
    %195 = sbr.rel (%p193) target = $region41
  $region40: #{bert_forward.13} parent=0 // pred_region
    %v196 = vld [vmem:[#allocation2] sm:$0xff]
    %v197 = vld [vmem:[#allocation2 + $0x8] sm:$0xff]
    %v198 = vld [vmem:[%s4] sm:$0x1]
    %v200 = vperm.slane %v198, 0
    %v202 = vadd.f32 %v196, %v200
    %v203 = vadd.f32 %v197, %v200
    %v204 = vld [vmem:[%s5] sm:$0xf]
    %v205 = vld [vmem:[%s5 + $0x4] sm:$0xf]
    %v206 = vunpack.c.l.bf16 %v204
    %v207 = vunpack.c.l.bf16 %v205
    %v208 = vadd.f32 %v202, %v206
    %v209 = vadd.f32 %v203, %v207
    %v210 = vsel %vm64, %v208, 0.0
    %211 = vadd.xlane.f32.xlu0 %v210
    %v212 = vpop.xlane.xlu0 %211
    %v213 = vsel %vm64, %v209, 0.0
    %214 = vadd.xlane.f32.xlu0 %v213
    %v215 = vpop.xlane.xlu0 %214
    %v216 = vrcp.pop 32.0
    %v217 = vmul.f32 32.0, %v216
    %v218 = vsub.f32 1.0, %v217
    %v219 = vmul.f32 %v216, %v218
    %v220 = vadd.f32 %v216, %v219
    %vm221 = vweird.f32 %v216
    %v222 = vsel %vm221, %v216, %v220
    %v223 = vmul.f32 %v212, %v222
    %v224 = vmul.f32 %v215, %v222
    %v225 = vsub.f32 %v208, %v223
    %v226 = vsub.f32 %v209, %v224
    %v227 = vmul.f32 %v225, %v225
    %v228 = vmul.f32 %v226, %v226
    %v229 = vsel %vm64, %v227, 0.0
    %230 = vadd.xlane.f32.xlu0 %v229
    %v231 = vpop.xlane.xlu0 %230
    %v232 = vsel %vm64, %v228, 0.0
    %233 = vadd.xlane.f32.xlu0 %v232
    %v234 = vpop.xlane.xlu0 %233
    %v235 = vmul.f32 %v231, %v222
    %v236 = vmul.f32 %v234, %v222
    %v237 = vadd.f32 %v235, 1e-05
    %v238 = vadd.f32 %v236, 1e-05
    %v239 = vrsqrt.pop %v237
    %v240 = vmul.f32 %v239, %v237
    %v241 = vmul.f32 %v240, %v239
    %v242 = vmul.f32 0.5, %v241
    %v243 = vsub.f32 1.5, %v242
    %v244 = vmul.f32 %v239, %v243
    %vm245 = vweird.f32 %v237
    %vm246 = vweird.f32 %v239
    %vm247 = vmor %vm245, %vm246
    %v248 = vsel %vm247, %v239, %v244
    %v249 = vrsqrt.pop %v238
    %v250 = vmul.f32 %v249, %v238
    %v251 = vmul.f32 %v250, %v249
    %v252 = vmul.f32 0.5, %v251
    %v253 = vsub.f32 1.5, %v252
    %v254 = vmul.f32 %v249, %v253
    %vm255 = vweird.f32 %v238
    %vm256 = vweird.f32 %v249
    %vm257 = vmor %vm255, %vm256
    %v258 = vsel %vm257, %v249, %v254
    %v259 = vmul.f32 %v225, %v248
    %v260 = vmul.f32 %v226, %v258
    %v261 = vld [vmem:[%s6] sm:$0x1]
    %v263 = vperm.slane %v261, 0
    %v265 = vmul.f32 %v259, %v263
    %v266 = vmul.f32 %v260, %v263
    %v267 = vld [vmem:[%s7] sm:$0x1]
    %v269 = vperm.slane %v267, 0
    %v271 = vadd.f32 %v265, %v269
    %v272 = vadd.f32 %v266, %v269
    %v273 = vpack.c.bf16 %v271, %v271
    %v274 = vpack.c.bf16 %v272, %v272
    %vm275 = vcmask 257024
    %276 = vst.msk [vmem:[%s8] sm:$0xf] %vm275, %v273
    %277 = vst.msk [vmem:[%s8 + $0x4] sm:$0xf] %vm275, %v274
  $region41: #{bert_forward.13} parent=0 // pred_fallthru
    _
  // Predicated region
  $region42: #{bert_forward.13} parent=0 // pred_check
    _
  $region43: #{bert_forward.13} parent=0 // pred_check_branch
    %279 = sbr.rel (0) target = $region45
  $region44: #{bert_forward.13} parent=0 // pred_region
    _
  $region45: #{bert_forward.13} parent=0 // pred_fallthru
    _
  // Predicated region
  $region46: #{bert_forward.13} parent=0 // pred_check
    _
  $region47: #{bert_forward.13} parent=0 // pred_check_branch
    %281 = sbr.rel (0) target = $region49
  $region48: #{bert_forward.13} parent=0 // pred_region
    _
  $region49: #{bert_forward.13} parent=0 // pred_fallthru
    _

// kernel: bert_forward.19
$region0: #{bert_forward.19}
  #allocation0 [shape = 'u32[]', space=smem, size = 0x4, offset = 0x4, fixed_abs, tag = 'smem constant byte address 0x4 - core index']
  #allocation1 [shape = 'u32[72,128]{1,0:T(1,128)}', space=vmem, size = 0x9000, scoped, tag = 'internal scratch']
  #allocation2 [shape = 'f32[4,128]{1,0:T(4,128)}', space=vmem, size = 0x800, scoped, tag = 'scratch operand']
  %s0 = inlined_call_operand.vmem [shape: bf16[4,32], index: 0, kind: input, shape index: {}]
  %s1 = inlined_call_operand.vmem [shape: bf16[32,128], index: 1, kind: input, shape index: {}]
  %s2 = inlined_call_operand.vmem [shape: f32[1,128], index: 2, kind: input, shape index: {}]
  %s3 = inlined_call_operand.hbm [shape: bf16[4,128], index: 3, kind: output, shape index: {}]
  %s4 = sld [smem:[#allocation0]]
  $region30: #{bert_forward.19} parent=0
    _
  %s6 = ssub.s32 1, %s4
  %s7 = scalar_select 0, %s6, %s4
  $region1: #{bert_forward.19} parent=0
    #allocation3 [shape = 'u8[1024]{0}', space=vmem, size = 0x400, scoped, tag = 'output window, operand 0, single buffered']
    #allocation4 [shape = 's32[1]{0}', space=sflag, size = 0x4, scoped, tag = 'scoped memory for bert_forward.19']
    %8 = vsyncpa [#allocation4], 0
    // Predicated region
    $region2: #{bert_forward.19} parent=1 // pred_check
      _
    $region3: #{bert_forward.19} parent=1 // pred_check_branch
      %10 = sbr.rel (0) target = $region5
    $region4: #{bert_forward.19} parent=1 // pred_region
      _
    $region5: #{bert_forward.19} parent=1 // pred_fallthru
      _
    // Predicated region
    $region6: #{bert_forward.19} parent=1 // pred_check
      _
    $region7: #{bert_forward.19} parent=1 // pred_check_branch
      %12 = sbr.rel (0) target = $region9
    $region8: #{bert_forward.19} parent=1 // pred_region
      _
    $region9: #{bert_forward.19} parent=1 // pred_fallthru
      _
    // Predicated region
    $region10: #{bert_forward.19} parent=1 // pred_check
      _
    $region11: #{bert_forward.19} parent=1 // pred_check_branch
      %14 = sbr.rel (0) target = $region13
    $region12: #{bert_forward.19} parent=1 // pred_region
      _
    $region13: #{bert_forward.19} parent=1 // pred_fallthru
      _
    %p16 = scmp.eq.s32.totalorder 0, 0
    // Predicated region
    $region14: #{bert_forward.19} parent=1 // pred_check
      %p17 = pneg %p16
    $region15: #{bert_forward.19} parent=1 // pred_check_branch
      %19 = sbr.rel (%p17) target = $region17
    $region16: #{bert_forward.19} parent=1 // pred_region
      %20 = vst [vmem:[#allocation2] sm:$0xf] 0.0
    $region17: #{bert_forward.19} parent=1 // pred_fallthru
      _
    %v21 = vld [vmem:[#allocation2] sm:$0xf]
    %v22 = vld [vmem:[%s0] sm:$0x3]
    %v23 = vld [vmem:[%s1] sm:$0xf]
    %v24 = vld [vmem:[%s1 + $0x4] sm:$0xf]
    %v25 = vld [vmem:[%s1 + $0x8] sm:$0xf]
    %v26 = vld [vmem:[%s1 + $0xc] sm:$0xf]
    %v31 = vunpack.c.l.b16 %v23
    %v32 = vunpack.c.l.b16 %v24
    %v33 = vunpack.c.l.b16 %v25
    %v34 = vunpack.c.l.b16 %v26
    %v35 = vpack.c.b16 %v32, %v31
    %v36 = vpack.c.b16 %v34, %v33
    %vm39 = vcmask 261120
    %v41 = vsel %vm39, %v22, 0
    %43 = vmatpush.bf16.msra.mxu0 0
    %44 = vmatpush.bf16.msra.mxu0 0
    %45 = vmatpush.bf16.msra.mxu0 0
    %46 = vmatpush.bf16.msra.mxu0 0
    %47 = vmatpush.bf16.msra.mxu0 0
    %48 = vmatpush.bf16.msra.mxu0 0
    %49 = vmatpush.bf16.msra.mxu0 %v36
    %50 = vmatpush.bf16.msra.mxu0 %v35
    %51 = vmatmul.bf16.gmra.mxu0 %v41
    %v52 = vpop.f32.mrf.mxu0
    %v53 = vadd.f32 0.0, %v52
    %v54 = vpop.f32.mrf.mxu0
    %55 = vdwg.mxu0
    %v56 = vadd.f32 %v21, %v53
    %57 = vst [vmem:[#allocation2] sm:$0xf] %v56
    // Predicated region
    $region18: #{bert_forward.19} parent=1 // pred_check
      %p58 = pneg %p16
    $region19: #{bert_forward.19} parent=1 // pred_check_branch
      %60 = sbr.rel (%p58) target = $region21
    $region20: #{bert_forward.19} parent=1 // pred_region
      %v61 = vld [vmem:[#allocation2] sm:$0xf]
      %v62 = vld [vmem:[%s2] sm:$0x1]
      %v64 = vperm.slane %v62, 0
      %v66 = vadd.f32 %v61, %v64
      %v67 = vpack.c.bf16 %v66, %v66
      %68 = vst [vmem:[#allocation3] sm:$0x3] %v67
    $region21: #{bert_forward.19} parent=1 // pred_fallthru
      _
    // Predicated region
    $region22: #{bert_forward.19} parent=1 // pred_check
      _
    $region23: #{bert_forward.19} parent=1 // pred_check_branch
      %70 = sbr.rel (0) target = $region25
    $region24: #{bert_forward.19} parent=1 // pred_region
      %72 = vsyncadd [#allocation4], 0
      %s74 = sshll.u32 [#allocation3], 4
      %s75 = int_to_ptr.vmem [resolvable:$true] %s74
      %s76 = sshll.u32 %s3, 4
      %s77 = int_to_ptr.hbm [resolvable:$true] %s76
      %79 = dma.vmem_to_hbm [thread:$0]  %s75, 32, %s77, [#allocation4]
    $region25: #{bert_forward.19} parent=1 // pred_fallthru
      _
    // Predicated region
    $region26: #{bert_forward.19} parent=1 // pred_check
      _
    $region27: #{bert_forward.19} parent=1 // pred_check_branch
      %81 = sbr.rel (0) target = $region29
    $region28: #{bert_forward.19} parent=1 // pred_region
      %83 = dma.done [#allocation4], 32
    $region29: #{bert_forward.19} parent=1 // pred_fallthru
      _
    %84 = vsyncpa [#allocation4], 1

// kernel: bert_forward.18
$region0: #{bert_forward.18}
  #allocation0 [shape = 'u32[]', space=smem, size = 0x4, offset = 0x4, fixed_abs, tag = 'smem constant byte address 0x4 - core index']
  #allocation1 [shape = 'u32[72,128]{1,0:T(1,128)}', space=vmem, size = 0x9000, scoped, tag = 'internal scratch']
  #allocation2 [shape = 'f32[2,128]{1,0:T(2,128)}', space=vmem, size = 0x400, scoped, tag = 'scratch operand']
  %s0 = inlined_call_operand.vmem [shape: bf16[2,32], index: 0, kind: input, shape index: {}]
  %s1 = inlined_call_operand.vmem [shape: bf16[32,128], index: 1, kind: input, shape index: {}]
  %s2 = inlined_call_operand.vmem [shape: f32[1,128], index: 2, kind: input, shape index: {}]
  %s3 = inlined_call_operand.hbm [shape: bf16[2,128], index: 3, kind: output, shape index: {}]
  %s4 = sld [smem:[#allocation0]]
  $region30: #{bert_forward.18} parent=0
    _
  %s6 = ssub.s32 1, %s4
  %s7 = scalar_select 0, %s6, %s4
  $region1: #{bert_forward.18} parent=0
    #allocation3 [shape = 'u8[512]{0}', space=vmem, size = 0x400, scoped, tag = 'output window, operand 0, single buffered']
    #allocation4 [shape = 's32[1]{0}', space=sflag, size = 0x4, scoped, tag = 'scoped memory for bert_forward.18']
    %8 = vsyncpa [#allocation4], 0
    // Predicated region
    $region2: #{bert_forward.18} parent=1 // pred_check
      _
    $region3: #{bert_forward.18} parent=1 // pred_check_branch
      %10 = sbr.rel (0) target = $region5
    $region4: #{bert_forward.18} parent=1 // pred_region
      _
    $region5: #{bert_forward.18} parent=1 // pred_fallthru
      _
    // Predicated region
    $region6: #{bert_forward.18} parent=1 // pred_check
      _
    $region7: #{bert_forward.18} parent=1 // pred_check_branch
      %12 = sbr.rel (0) target = $region9
    $region8: #{bert_forward.18} parent=1 // pred_region
      _
    $region9: #{bert_forward.18} parent=1 // pred_fallthru
      _
    // Predicated region
    $region10: #{bert_forward.18} parent=1 // pred_check
      _
    $region11: #{bert_forward.18} parent=1 // pred_check_branch
      %14 = sbr.rel (0) target = $region13
    $region12: #{bert_forward.18} parent=1 // pred_region
      _
    $region13: #{bert_forward.18} parent=1 // pred_fallthru
      _
    %p16 = scmp.eq.s32.totalorder 0, 0
    // Predicated region
    $region14: #{bert_forward.18} parent=1 // pred_check
      %p17 = pneg %p16
    $region15: #{bert_forward.18} parent=1 // pred_check_branch
      %19 = sbr.rel (%p17) target = $region17
    $region16: #{bert_forward.18} parent=1 // pred_region
      %20 = vst [vmem:[#allocation2] sm:$0x3] 0.0
    $region17: #{bert_forward.18} parent=1 // pred_fallthru
      _
    %v21 = vld [vmem:[#allocation2] sm:$0x3]
    %v22 = vld [vmem:[%s0] sm:$0x1]
    %v23 = vld [vmem:[%s1] sm:$0xf]
    %v24 = vld [vmem:[%s1 + $0x4] sm:$0xf]
    %v25 = vld [vmem:[%s1 + $0x8] sm:$0xf]
    %v26 = vld [vmem:[%s1 + $0xc] sm:$0xf]
    %v31 = vunpack.c.l.b16 %v23
    %v32 = vunpack.c.l.b16 %v24
    %v33 = vunpack.c.l.b16 %v25
    %v34 = vunpack.c.l.b16 %v26
    %v35 = vpack.c.b16 %v32, %v31
    %v36 = vpack.c.b16 %v34, %v33
    %vm39 = vcmask 261120
    %v41 = vsel %vm39, %v22, 0
    %43 = vmatpush.bf16.msra.mxu0 0
    %44 = vmatpush.bf16.msra.mxu0 0
    %45 = vmatpush.bf16.msra.mxu0 0
    %46 = vmatpush.bf16.msra.mxu0 0
    %47 = vmatpush.bf16.msra.mxu0 0
    %48 = vmatpush.bf16.msra.mxu0 0
    %49 = vmatpush.bf16.msra.mxu0 %v36
    %50 = vmatpush.bf16.msra.mxu0 %v35
    %51 = vmatmul.bf16.gmra.mxu0 %v41
    %v52 = vpop.f32.mrf.mxu0
    %v53 = vadd.f32 0.0, %v52
    %v54 = vpop.f32.mrf.mxu0
    %55 = vdwg.mxu0
    %v56 = vadd.f32 %v21, %v53
    %57 = vst [vmem:[#allocation2] sm:$0x3] %v56
    // Predicated region
    $region18: #{bert_forward.18} parent=1 // pred_check
      %p58 = pneg %p16
    $region19: #{bert_forward.18} parent=1 // pred_check_branch
      %60 = sbr.rel (%p58) target = $region21
    $region20: #{bert_forward.18} parent=1 // pred_region
      %v61 = vld [vmem:[#allocation2] sm:$0x3]
      %v62 = vld [vmem:[%s2] sm:$0x1]
      %v64 = vperm.slane %v62, 0
      %v66 = vadd.f32 %v61, %v64
      %v67 = vpack.c.bf16 %v66, %v66
      %68 = vst [vmem:[#allocation3] sm:$0x1] %v67
    $region21: #{bert_forward.18} parent=1 // pred_fallthru
      _
    // Predicated region
    $region22: #{bert_forward.18} parent=1 // pred_check
      _
    $region23: #{bert_forward.18} parent=1 // pred_check_branch
      %70 = sbr.rel (0) target = $region25
    $region24: #{bert_forward.18} parent=1 // pred_region
      %72 = vsyncadd [#allocation4], 0
      %s74 = sshll.u32 [#allocation3], 4
      %s75 = int_to_ptr.vmem [resolvable:$true] %s74
      %s76 = sshll.u32 %s3, 4
      %s77 = int_to_ptr.hbm [resolvable:$true] %s76
      %79 = dma.vmem_to_hbm [thread:$0]  %s75, 16, %s77, [#allocation4]
    $region25: #{bert_forward.18} parent=1 // pred_fallthru
      _
    // Predicated region
    $region26: #{bert_forward.18} parent=1 // pred_check
      _
    $region27: #{bert_forward.18} parent=1 // pred_check_branch
      %81 = sbr.rel (0) target = $region29
    $region28: #{bert_forward.18} parent=1 // pred_region
      %83 = dma.done [#allocation4], 16
    $region29: #{bert_forward.18} parent=1 // pred_fallthru
      _
    %84 = vsyncpa [#allocation4], 1

</llo_original>
